<compile_context>
chip_gen: v5e
topology: v5e:2x2
jax: 0.10.0
libtpu: 0.0.40
codegen_flags: <defaults>
</compile_context>

<pallas_src>
import jax
import jax.numpy as jnp
from jax import lax
from jax.experimental import pallas as pl
from jax.experimental.pallas import tpu as pltpu


# ---------------------------------------------------------------------------
# Kernel 1: attention (key padding mask) + relevance gate + fused LSTM input
# projections.  Grid over batch tiles ("parallel").
# ---------------------------------------------------------------------------
def attn_gate_proj_kernel(v_ref, mask_ref,
                          wq_ref, wk_ref, wv_ref, bq_ref, bk_ref, bv_ref,
                          wo_ref, bo_ref,
                          wgv_ref, wga_ref,
                          wfv_ref, wfa_ref, bf_ref,
                          wbv_ref, wba_ref, bb_ref,
                          xf_ref, xb_ref):
    v = v_ref[...]                          # (TB, S, E) f32
    mask = mask_ref[...]                    # (TB, S)    f32, 1.0 = valid key
    TB, S, E = v.shape
    G = bf_ref.shape[-1]

    v2 = v.reshape(TB * S, E)
    v2b = v2.astype(jnp.bfloat16)

    # q/k/v projections as tall (TB*S, E)@(E, E) bf16 matmuls; scale folded into q.
    scale = 1.0 / jnp.sqrt(jnp.float32(E))
    q = (jnp.dot(v2b, wq_ref[...], preferred_element_type=jnp.float32)
         + bq_ref[...]) * scale
    k = jnp.dot(v2b, wk_ref[...], preferred_element_type=jnp.float32) + bk_ref[...]
    val = jnp.dot(v2b, wv_ref[...], preferred_element_type=jnp.float32) + bv_ref[...]

    q3 = q.reshape(TB, S, E).astype(jnp.bfloat16)
    k3 = k.reshape(TB, S, E).astype(jnp.bfloat16)
    v3 = val.reshape(TB, S, E).astype(jnp.bfloat16)

    # masked softmax over keys (all statistics in f32; mask constant f32-safe)
    s = jnp.einsum('bqd,bkd->bqk', q3, k3, preferred_element_type=jnp.float32)
    s = jnp.where(mask[:, None, :] > 0.5, s, jnp.float32(-1e30))
    s = s - jnp.max(s, axis=-1, keepdims=True)
    p = jnp.exp(s)
    p = p * pl.reciprocal(jnp.sum(p, axis=-1, keepdims=True), approx=True)

    attn = jnp.einsum('bqk,bkd->bqd', p.astype(jnp.bfloat16), v3,
                      preferred_element_type=jnp.float32)          # (TB, S, E)
    att2 = attn.reshape(TB * S, E).astype(jnp.bfloat16)
    attended = jnp.dot(att2, wo_ref[...],
                       preferred_element_type=jnp.float32) + bo_ref[...]
    att_b = attended.astype(jnp.bfloat16)

    # relevance gate: sigmoid([v, attended] @ Wg^T), split to avoid lane concat
    gate = jax.nn.sigmoid(
        jnp.dot(v2b, wgv_ref[...], preferred_element_type=jnp.float32)
        + jnp.dot(att_b, wga_ref[...], preferred_element_type=jnp.float32))  # (TB*S, 2E)
    gv = (gate[:, :E] * v2).astype(jnp.bfloat16)        # gated v half
    ga = (gate[:, E:] * attended).astype(jnp.bfloat16)  # gated attended half

    # fused LSTM input projections (forward & backward), split the same way
    xf = (jnp.dot(gv, wfv_ref[...], preferred_element_type=jnp.float32)
          + jnp.dot(ga, wfa_ref[...], preferred_element_type=jnp.float32)
          + bf_ref[...])                                 # (TB*S, G)
    xb = (jnp.dot(gv, wbv_ref[...], preferred_element_type=jnp.float32)
          + jnp.dot(ga, wba_ref[...], preferred_element_type=jnp.float32)
          + bb_ref[...])

    # emit time-major (S, TB, G) for the recurrence kernel (per-batch static stores)
    xf3 = xf.reshape(TB, S, G)
    xb3 = xb.reshape(TB, S, G)
    for b in range(TB):
        xf_ref[:, b, :] = xf3[b]
        xb_ref[:, b, :] = xb3[b]


# ---------------------------------------------------------------------------
# Kernel 2: bidirectional single-layer LSTM recurrence, batched across the
# batch tile.  Per timestep: one (TB,H)@(H,4H) bf16 matmul per direction.
# Padded steps freeze (h, c) and emit zeros (pad_packed_sequence semantics).
# ---------------------------------------------------------------------------
def bilstm_kernel(xf_ref, xb_ref, mask_ref, whh_f_ref, whh_b_ref,
                  outf_ref, outb_ref):
    S, TB, G = xf_ref.shape
    H = whh_f_ref.shape[0]
    whh_f = whh_f_ref[...]                  # (H, G) bf16
    whh_b = whh_b_ref[...]

    def cell(g_pre, h, c, whh):
        g = g_pre + jnp.dot(h.astype(jnp.bfloat16), whh,
                            preferred_element_type=jnp.float32)     # (TB, G)
        i = jax.nn.sigmoid(g[:, 0:H])
        f = jax.nn.sigmoid(g[:, H:2 * H])
        u = jnp.tanh(g[:, 2 * H:3 * H])
        o = jax.nn.sigmoid(g[:, 3 * H:4 * H])
        c_new = f * c + i * u
        h_new = o * jnp.tanh(c_new)
        return h_new, c_new

    zeros = jnp.zeros((TB, H), jnp.float32)

    def fwd(t, carry):
        h, c = carry
        valid = mask_ref[t] > 0.5                        # (TB, 1)
        h_new, c_new = cell(xf_ref[t], h, c, whh_f)
        outf_ref[t] = jnp.where(valid, h_new, 0.0)
        return (jnp.where(valid, h_new, h), jnp.where(valid, c_new, c))

    lax.fori_loop(0, S, fwd, (zeros, zeros))

    def bwd(i, carry):
        t = S - 1 - i
        h, c = carry
        valid = mask_ref[t] > 0.5
        h_new, c_new = cell(xb_ref[t], h, c, whh_b)
        outb_ref[t] = jnp.where(valid, h_new, 0.0)
        return (jnp.where(valid, h_new, h), jnp.where(valid, c_new, c))

    lax.fori_loop(0, S, bwd, (zeros, zeros))


# ---------------------------------------------------------------------------
# Wrapper
# ---------------------------------------------------------------------------
def self_attention_bidaf(v, c_mask, params):
    B, S, E = v.shape
    H = E // 2
    G = 4 * H                      # LSTM gate dim (== concat dim D = 2E)

    bf16 = jnp.bfloat16
    f32 = jnp.float32

    mask2 = c_mask.astype(f32)                      # (B, S) for attention keys
    mask_t = jnp.transpose(mask2)[:, :, None]       # (S, B, 1) time-major for LSTM

    # MXU operands in bf16 (accumulation stays f32 inside the kernels)
    wq = params["wq_t"].astype(bf16)
    wk = params["wk_t"].astype(bf16)
    wv = params["wv_t"].astype(bf16)
    wo = params["wo_t"].astype(bf16)
    wg = params["wg_t"]
    wgv, wga = wg[:E].astype(bf16), wg[E:].astype(bf16)
    wf = params["wih_f_t"]
    wfv, wfa = wf[:E].astype(bf16), wf[E:].astype(bf16)
    wb = params["wih_b_t"]
    wbv, wba = wb[:E].astype(bf16), wb[E:].astype(bf16)
    whh_f = params["whh_f_t"].astype(bf16)
    whh_b = params["whh_b_t"].astype(bf16)

    TB = B                         # batch tile (full batch at these small sizes)
    nb = B // TB

    def full(shape):
        n = len(shape)
        return pl.BlockSpec(shape, lambda b, _n=n: (0,) * _n)

    # Kernel 1: attention + gate + fused LSTM input projections (parallel over batch tiles)
    xf, xb = pl.pallas_call(
        attn_gate_proj_kernel,
        out_shape=(jax.ShapeDtypeStruct((S, B, G), f32),
                   jax.ShapeDtypeStruct((S, B, G), f32)),
        grid=(nb,),
        in_specs=[
            pl.BlockSpec((TB, S, E), lambda b: (b, 0, 0)),   # v
            pl.BlockSpec((TB, S), lambda b: (b, 0)),         # key mask
            full((E, E)), full((E, E)), full((E, E)),        # Wq^T, Wk^T, Wv^T
            full((1, E)), full((1, E)), full((1, E)),        # bq, bk, bv
            full((E, E)), full((1, E)),                      # Wo^T, bo
            full((E, 2 * E)), full((E, 2 * E)),              # Wg^T split (v rows / att rows)
            full((E, G)), full((E, G)), full((1, G)),        # fwd Wih^T split + bias
            full((E, G)), full((E, G)), full((1, G)),        # bwd Wih^T split + bias
        ],
        out_specs=(pl.BlockSpec((S, TB, G), lambda b: (0, b, 0)),
                   pl.BlockSpec((S, TB, G), lambda b: (0, b, 0))),
        compiler_params=pltpu.CompilerParams(dimension_semantics=("parallel",)),
    )(v, mask2, wq, wk, wv,
      params["bq"], params["bk"], params["bv"],
      wo, params["bo"], wgv, wga,
      wfv, wfa, params["b_f"], wbv, wba, params["b_b"])

    # Kernel 2: batched bidirectional LSTM recurrence
    out_f, out_b = pl.pallas_call(
        bilstm_kernel,
        out_shape=(jax.ShapeDtypeStruct((S, B, H), f32),
                   jax.ShapeDtypeStruct((S, B, H), f32)),
        grid=(nb,),
        in_specs=[
            pl.BlockSpec((S, TB, G), lambda b: (0, b, 0)),   # xf (time-major)
            pl.BlockSpec((S, TB, G), lambda b: (0, b, 0)),   # xb (time-major)
            pl.BlockSpec((S, TB, 1), lambda b: (0, b, 0)),   # mask (time-major)
            full((H, G)), full((H, G)),                      # Whh_f^T, Whh_b^T
        ],
        out_specs=(pl.BlockSpec((S, TB, H), lambda b: (0, b, 0)),
                   pl.BlockSpec((S, TB, H), lambda b: (0, b, 0))),
        compiler_params=pltpu.CompilerParams(dimension_semantics=("parallel",)),
    )(xf, xb, mask_t, whh_f, whh_b)

    out = jnp.concatenate([out_f, out_b], axis=-1)   # (S, B, 2H)
    return jnp.transpose(out, (1, 0, 2))             # (B, S, 2H)


# ---------------------------------------------------------------------------
# Deterministic parameter construction (shapes implied by the module __init__)
# ---------------------------------------------------------------------------
def init_params(key, hidden_size):
    H = hidden_size
    E = 2 * H
    D = 4 * H
    G = 4 * H
    ks = jax.random.split(key, 12)
    u = lambda k, shape: jax.random.uniform(k, shape, jnp.float32, -0.1, 0.1)

    in_proj_w = u(ks[0], (3 * E, E))      # MultiheadAttention.in_proj_weight
    in_proj_b = u(ks[1], (3 * E,))        # MultiheadAttention.in_proj_bias
    out_proj_w = u(ks[2], (E, E))         # MultiheadAttention.out_proj
    out_proj_b = u(ks[3], (E,))
    wg = u(ks[4], (D, D))                 # RelevanceGate (bias=False)

    wih_f = u(ks[5], (G, D))              # LSTM weight_ih_l0
    whh_f = u(ks[6], (G, H))              # LSTM weight_hh_l0
    b_ih_f = u(ks[7], (G,))
    b_hh_f = u(ks[8], (G,))
    wih_b = u(ks[9], (G, D))              # LSTM weight_ih_l0_reverse
    whh_b = u(ks[10], (G, H))
    b_ih_b = u(ks[11], (G,))
    b_hh_b = -0.5 * b_ih_f                # deterministic, arbitrary

    return dict(
        wq_t=in_proj_w[0:E].T, wk_t=in_proj_w[E:2 * E].T, wv_t=in_proj_w[2 * E:3 * E].T,
        bq=in_proj_b[0:E].reshape(1, E),
        bk=in_proj_b[E:2 * E].reshape(1, E),
        bv=in_proj_b[2 * E:3 * E].reshape(1, E),
        wo_t=out_proj_w.T, bo=out_proj_b.reshape(1, E),
        wg_t=wg.T,
        wih_f_t=wih_f.T, whh_f_t=whh_f.T, b_f=(b_ih_f + b_hh_f).reshape(1, G),
        wih_b_t=wih_b.T, whh_b_t=whh_b.T, b_b=(b_ih_b + b_hh_b).reshape(1, G),
    )


if __name__ == "__main__":
    B, S, H = 2, 8, 16           # batch, seq_len, hidden_size
    E = 2 * H

    key = jax.random.PRNGKey(0)
    k_param, k_v = jax.random.split(key)
    params = init_params(k_param, H)

    v = jax.random.normal(k_v, (B, S, E), jnp.float32)
    lengths = jnp.array([S, 5], jnp.int32)
    c_mask = jnp.arange(S)[None, :] < lengths[:, None]   # (B, S) bool prefix mask

    out = jax.jit(self_attention_bidaf)(v, c_mask, params)
    out = jax.block_until_ready(out)

    assert out.shape == (B, S, E), out.shape
    assert bool(jnp.all(jnp.isfinite(out)))
    # padded positions must be exactly zero (pad_packed_sequence semantics)
    assert bool(jnp.all(out[1, 5:, :] == 0.0))

    print("KERNEL_OK")
</pallas_src>

<mosaic_0001>
module attributes {stable_mosaic.version = 11 : i64} {
  func.func @attn_gate_proj_kernel(%arg0: i32, %arg1: memref<2x8x32xf32, #tpu.memory_space<vmem>>, %arg2: memref<2x8xf32, #tpu.memory_space<vmem>>, %arg3: memref<32x32xbf16, #tpu.memory_space<vmem>>, %arg4: memref<32x32xbf16, #tpu.memory_space<vmem>>, %arg5: memref<32x32xbf16, #tpu.memory_space<vmem>>, %arg6: memref<1x32xf32, #tpu.memory_space<vmem>>, %arg7: memref<1x32xf32, #tpu.memory_space<vmem>>, %arg8: memref<1x32xf32, #tpu.memory_space<vmem>>, %arg9: memref<32x32xbf16, #tpu.memory_space<vmem>>, %arg10: memref<1x32xf32, #tpu.memory_space<vmem>>, %arg11: memref<32x64xbf16, #tpu.memory_space<vmem>>, %arg12: memref<32x64xbf16, #tpu.memory_space<vmem>>, %arg13: memref<32x64xbf16, #tpu.memory_space<vmem>>, %arg14: memref<32x64xbf16, #tpu.memory_space<vmem>>, %arg15: memref<1x64xf32, #tpu.memory_space<vmem>>, %arg16: memref<32x64xbf16, #tpu.memory_space<vmem>>, %arg17: memref<32x64xbf16, #tpu.memory_space<vmem>>, %arg18: memref<1x64xf32, #tpu.memory_space<vmem>>, %arg19: memref<8x2x64xf32, #tpu.memory_space<vmem>>, %arg20: memref<8x2x64xf32, #tpu.memory_space<vmem>>) attributes {dimension_semantics = [#tpu.dimension_semantics<parallel>], iteration_bounds = array<i64: 1>, scalar_prefetch = 0 : i64, scratch_operands = 0 : i64, tpu.core_type = #tpu.core_type<tc>, window_params = [{transform_indices = @transform_0, window_bounds = array<i64: 2, 8, 32>}, {transform_indices = @transform_1, window_bounds = array<i64: 2, 8>}, {pipeline_mode = #tpu.pipeline_mode<synchronous>, transform_indices = @transform_2, window_bounds = array<i64: 32, 32>}, {pipeline_mode = #tpu.pipeline_mode<synchronous>, transform_indices = @transform_3, window_bounds = array<i64: 32, 32>}, {pipeline_mode = #tpu.pipeline_mode<synchronous>, transform_indices = @transform_4, window_bounds = array<i64: 32, 32>}, {pipeline_mode = #tpu.pipeline_mode<synchronous>, transform_indices = @transform_5, window_bounds = array<i64: 1, 32>}, {pipeline_mode = #tpu.pipeline_mode<synchronous>, transform_indices = @transform_6, window_bounds = array<i64: 1, 32>}, {pipeline_mode = #tpu.pipeline_mode<synchronous>, transform_indices = @transform_7, window_bounds = array<i64: 1, 32>}, {pipeline_mode = #tpu.pipeline_mode<synchronous>, transform_indices = @transform_8, window_bounds = array<i64: 32, 32>}, {pipeline_mode = #tpu.pipeline_mode<synchronous>, transform_indices = @transform_9, window_bounds = array<i64: 1, 32>}, {pipeline_mode = #tpu.pipeline_mode<synchronous>, transform_indices = @transform_10, window_bounds = array<i64: 32, 64>}, {pipeline_mode = #tpu.pipeline_mode<synchronous>, transform_indices = @transform_11, window_bounds = array<i64: 32, 64>}, {pipeline_mode = #tpu.pipeline_mode<synchronous>, transform_indices = @transform_12, window_bounds = array<i64: 32, 64>}, {pipeline_mode = #tpu.pipeline_mode<synchronous>, transform_indices = @transform_13, window_bounds = array<i64: 32, 64>}, {pipeline_mode = #tpu.pipeline_mode<synchronous>, transform_indices = @transform_14, window_bounds = array<i64: 1, 64>}, {pipeline_mode = #tpu.pipeline_mode<synchronous>, transform_indices = @transform_15, window_bounds = array<i64: 32, 64>}, {pipeline_mode = #tpu.pipeline_mode<synchronous>, transform_indices = @transform_16, window_bounds = array<i64: 32, 64>}, {pipeline_mode = #tpu.pipeline_mode<synchronous>, transform_indices = @transform_17, window_bounds = array<i64: 1, 64>}, {transform_indices = @transform_18, window_bounds = array<i64: 8, 2, 64>}, {transform_indices = @transform_19, window_bounds = array<i64: 8, 2, 64>}]} {
    %c0 = arith.constant 0 : index
    %c0_0 = arith.constant 0 : index
    %c0_1 = arith.constant 0 : index
    %0 = vector.load %arg1[%c0, %c0_0, %c0_1] : memref<2x8x32xf32, #tpu.memory_space<vmem>>, vector<2x8x32xf32>
    %c0_2 = arith.constant 0 : index
    %c0_3 = arith.constant 0 : index
    %1 = vector.load %arg2[%c0_2, %c0_3] : memref<2x8xf32, #tpu.memory_space<vmem>>, vector<2x8xf32>
    %2 = vector.shape_cast %0 : vector<2x8x32xf32> to vector<16x32xf32>
    %3 = arith.truncf %2 : vector<16x32xf32> to vector<16x32xbf16>
    %cst = arith.constant 3.200000e+01 : f32
    %4 = math.sqrt %cst : f32
    %cst_4 = arith.constant 1.000000e+00 : f32
    %5 = arith.divf %cst_4, %4 : f32
    %c0_5 = arith.constant 0 : index
    %c0_6 = arith.constant 0 : index
    %6 = vector.load %arg3[%c0_5, %c0_6] : memref<32x32xbf16, #tpu.memory_space<vmem>>, vector<32x32xbf16>
    %cst_7 = arith.constant dense<0.000000e+00> : vector<16x32xf32>
    %7 = tpu.matmul %3, %6, %cst_7 {dimension_numbers = #tpu.dot_dimension_numbers<[1], [0], [0], [1], [0, 0, 1, 1], [], []>} : vector<16x32xbf16>, vector<32x32xbf16>, vector<16x32xf32> -> vector<16x32xf32>
    %c0_8 = arith.constant 0 : index
    %c0_9 = arith.constant 0 : index
    %8 = vector.load %arg6[%c0_8, %c0_9] : memref<1x32xf32, #tpu.memory_space<vmem>>, vector<1x32xf32>
    %9 = vector.broadcast %8 : vector<1x32xf32> to vector<16x32xf32>
    %10 = arith.addf %7, %9 : vector<16x32xf32>
    %11 = vector.broadcast %5 : f32 to vector<16x32xf32>
    %12 = arith.mulf %10, %11 : vector<16x32xf32>
    %c0_10 = arith.constant 0 : index
    %c0_11 = arith.constant 0 : index
    %13 = vector.load %arg4[%c0_10, %c0_11] : memref<32x32xbf16, #tpu.memory_space<vmem>>, vector<32x32xbf16>
    %cst_12 = arith.constant dense<0.000000e+00> : vector<16x32xf32>
    %14 = tpu.matmul %3, %13, %cst_12 {dimension_numbers = #tpu.dot_dimension_numbers<[1], [0], [0], [1], [0, 0, 1, 1], [], []>} : vector<16x32xbf16>, vector<32x32xbf16>, vector<16x32xf32> -> vector<16x32xf32>
    %c0_13 = arith.constant 0 : index
    %c0_14 = arith.constant 0 : index
    %15 = vector.load %arg7[%c0_13, %c0_14] : memref<1x32xf32, #tpu.memory_space<vmem>>, vector<1x32xf32>
    %16 = vector.broadcast %15 : vector<1x32xf32> to vector<16x32xf32>
    %17 = arith.addf %14, %16 : vector<16x32xf32>
    %c0_15 = arith.constant 0 : index
    %c0_16 = arith.constant 0 : index
    %18 = vector.load %arg5[%c0_15, %c0_16] : memref<32x32xbf16, #tpu.memory_space<vmem>>, vector<32x32xbf16>
    %cst_17 = arith.constant dense<0.000000e+00> : vector<16x32xf32>
    %19 = tpu.matmul %3, %18, %cst_17 {dimension_numbers = #tpu.dot_dimension_numbers<[1], [0], [0], [1], [0, 0, 1, 1], [], []>} : vector<16x32xbf16>, vector<32x32xbf16>, vector<16x32xf32> -> vector<16x32xf32>
    %c0_18 = arith.constant 0 : index
    %c0_19 = arith.constant 0 : index
    %20 = vector.load %arg8[%c0_18, %c0_19] : memref<1x32xf32, #tpu.memory_space<vmem>>, vector<1x32xf32>
    %21 = vector.broadcast %20 : vector<1x32xf32> to vector<16x32xf32>
    %22 = arith.addf %19, %21 : vector<16x32xf32>
    %23 = vector.shape_cast %12 : vector<16x32xf32> to vector<2x8x32xf32>
    %24 = arith.truncf %23 : vector<2x8x32xf32> to vector<2x8x32xbf16>
    %25 = vector.shape_cast %17 : vector<16x32xf32> to vector<2x8x32xf32>
    %26 = arith.truncf %25 : vector<2x8x32xf32> to vector<2x8x32xbf16>
    %27 = vector.shape_cast %22 : vector<16x32xf32> to vector<2x8x32xf32>
    %28 = arith.truncf %27 : vector<2x8x32xf32> to vector<2x8x32xbf16>
    "tpu.trace_start"() <{level = 10 : i32, message = "bqd,bkd->bqk"}> : () -> ()
    %cst_20 = arith.constant dense<0.000000e+00> : vector<2x8x8xf32>
    %29 = tpu.matmul %24, %26, %cst_20 {dimension_numbers = #tpu.dot_dimension_numbers<[2], [2], [1], [1], [0, 0, 0, 1, 1, 1], [0], [0]>} : vector<2x8x32xbf16>, vector<2x8x32xbf16>, vector<2x8x8xf32> -> vector<2x8x8xf32>
    "tpu.trace_stop"() : () -> ()
    %30 = vector.shape_cast %1 : vector<2x8xf32> to vector<2x1x8xf32>
    %cst_21 = arith.constant 5.000000e-01 : f32
    %31 = vector.broadcast %cst_21 : f32 to vector<2x1x8xf32>
    %32 = arith.cmpf ogt, %30, %31 : vector<2x1x8xf32>
    %cst_22 = arith.constant -1.000000e+30 : f32
    %33 = vector.shape_cast %32 : vector<2x1x8xi1> to vector<2x1x8xi1>
    %34 = vector.broadcast %33 : vector<2x1x8xi1> to vector<2x8x8xi1>
    %35 = vector.broadcast %cst_22 : f32 to vector<2x8x8xf32>
    %36 = arith.select %34, %29, %35 : vector<2x8x8xi1>, vector<2x8x8xf32>
    %cst_23 = arith.constant dense<0xFF800000> : vector<2x8xf32>
    %37 = vector.multi_reduction <maximumf>, %36, %cst_23 [2] : vector<2x8x8xf32> to vector<2x8xf32>
    %38 = vector.shape_cast %37 : vector<2x8xf32> to vector<2x8x1xf32>
    %39 = vector.broadcast %38 : vector<2x8x1xf32> to vector<2x8x8xf32>
    %40 = arith.subf %36, %39 : vector<2x8x8xf32>
    %41 = math.exp %40 : vector<2x8x8xf32>
    %cst_24 = arith.constant dense<0.000000e+00> : vector<2x8xf32>
    %42 = vector.multi_reduction <add>, %41, %cst_24 [2] : vector<2x8x8xf32> to vector<2x8xf32>
    %43 = vector.shape_cast %42 : vector<2x8xf32> to vector<2x8x1xf32>
    %44 = tpu.reciprocal %43 {approx = true} : vector<2x8x1xf32> -> vector<2x8x1xf32>
    %45 = vector.broadcast %44 : vector<2x8x1xf32> to vector<2x8x8xf32>
    %46 = arith.mulf %41, %45 : vector<2x8x8xf32>
    %47 = arith.truncf %46 : vector<2x8x8xf32> to vector<2x8x8xbf16>
    "tpu.trace_start"() <{level = 10 : i32, message = "bqk,bkd->bqd"}> : () -> ()
    %cst_25 = arith.constant dense<0.000000e+00> : vector<2x8x32xf32>
    %48 = tpu.matmul %47, %28, %cst_25 {dimension_numbers = #tpu.dot_dimension_numbers<[2], [1], [1], [2], [0, 0, 0, 1, 1, 2], [0], [0]>} : vector<2x8x8xbf16>, vector<2x8x32xbf16>, vector<2x8x32xf32> -> vector<2x8x32xf32>
    "tpu.trace_stop"() : () -> ()
    %49 = vector.shape_cast %48 : vector<2x8x32xf32> to vector<16x32xf32>
    %50 = arith.truncf %49 : vector<16x32xf32> to vector<16x32xbf16>
    %c0_26 = arith.constant 0 : index
    %c0_27 = arith.constant 0 : index
    %51 = vector.load %arg9[%c0_26, %c0_27] : memref<32x32xbf16, #tpu.memory_space<vmem>>, vector<32x32xbf16>
    %cst_28 = arith.constant dense<0.000000e+00> : vector<16x32xf32>
    %52 = tpu.matmul %50, %51, %cst_28 {dimension_numbers = #tpu.dot_dimension_numbers<[1], [0], [0], [1], [0, 0, 1, 1], [], []>} : vector<16x32xbf16>, vector<32x32xbf16>, vector<16x32xf32> -> vector<16x32xf32>
    %c0_29 = arith.constant 0 : index
    %c0_30 = arith.constant 0 : index
    %53 = vector.load %arg10[%c0_29, %c0_30] : memref<1x32xf32, #tpu.memory_space<vmem>>, vector<1x32xf32>
    %54 = vector.broadcast %53 : vector<1x32xf32> to vector<16x32xf32>
    %55 = arith.addf %52, %54 : vector<16x32xf32>
    %56 = arith.truncf %55 : vector<16x32xf32> to vector<16x32xbf16>
    %c0_31 = arith.constant 0 : index
    %c0_32 = arith.constant 0 : index
    %57 = vector.load %arg11[%c0_31, %c0_32] : memref<32x64xbf16, #tpu.memory_space<vmem>>, vector<32x64xbf16>
    %cst_33 = arith.constant dense<0.000000e+00> : vector<16x64xf32>
    %58 = tpu.matmul %3, %57, %cst_33 {dimension_numbers = #tpu.dot_dimension_numbers<[1], [0], [0], [1], [0, 0, 1, 1], [], []>} : vector<16x32xbf16>, vector<32x64xbf16>, vector<16x64xf32> -> vector<16x64xf32>
    %c0_34 = arith.constant 0 : index
    %c0_35 = arith.constant 0 : index
    %59 = vector.load %arg12[%c0_34, %c0_35] : memref<32x64xbf16, #tpu.memory_space<vmem>>, vector<32x64xbf16>
    %cst_36 = arith.constant dense<0.000000e+00> : vector<16x64xf32>
    %60 = tpu.matmul %56, %59, %cst_36 {dimension_numbers = #tpu.dot_dimension_numbers<[1], [0], [0], [1], [0, 0, 1, 1], [], []>} : vector<16x32xbf16>, vector<32x64xbf16>, vector<16x64xf32> -> vector<16x64xf32>
    %61 = arith.addf %58, %60 : vector<16x64xf32>
    %62 = arith.negf %61 : vector<16x64xf32>
    %63 = math.exp %62 : vector<16x64xf32>
    %cst_37 = arith.constant 1.000000e+00 : f32
    %64 = vector.broadcast %cst_37 : f32 to vector<16x64xf32>
    %65 = arith.addf %64, %63 : vector<16x64xf32>
    %66 = arith.divf %64, %65 : vector<16x64xf32>
    %67 = vector.extract_strided_slice %66 {offsets = [0, 0], sizes = [16, 32], strides = [1, 1]} : vector<16x64xf32> to vector<16x32xf32>
    %68 = arith.mulf %67, %2 : vector<16x32xf32>
    %69 = arith.truncf %68 : vector<16x32xf32> to vector<16x32xbf16>
    %70 = vector.extract_strided_slice %66 {offsets = [0, 32], sizes = [16, 32], strides = [1, 1]} : vector<16x64xf32> to vector<16x32xf32>
    %71 = arith.mulf %70, %55 : vector<16x32xf32>
    %72 = arith.truncf %71 : vector<16x32xf32> to vector<16x32xbf16>
    %c0_38 = arith.constant 0 : index
    %c0_39 = arith.constant 0 : index
    %73 = vector.load %arg13[%c0_38, %c0_39] : memref<32x64xbf16, #tpu.memory_space<vmem>>, vector<32x64xbf16>
    %cst_40 = arith.constant dense<0.000000e+00> : vector<16x64xf32>
    %74 = tpu.matmul %69, %73, %cst_40 {dimension_numbers = #tpu.dot_dimension_numbers<[1], [0], [0], [1], [0, 0, 1, 1], [], []>} : vector<16x32xbf16>, vector<32x64xbf16>, vector<16x64xf32> -> vector<16x64xf32>
    %c0_41 = arith.constant 0 : index
    %c0_42 = arith.constant 0 : index
    %75 = vector.load %arg14[%c0_41, %c0_42] : memref<32x64xbf16, #tpu.memory_space<vmem>>, vector<32x64xbf16>
    %cst_43 = arith.constant dense<0.000000e+00> : vector<16x64xf32>
    %76 = tpu.matmul %72, %75, %cst_43 {dimension_numbers = #tpu.dot_dimension_numbers<[1], [0], [0], [1], [0, 0, 1, 1], [], []>} : vector<16x32xbf16>, vector<32x64xbf16>, vector<16x64xf32> -> vector<16x64xf32>
    %77 = arith.addf %74, %76 : vector<16x64xf32>
    %c0_44 = arith.constant 0 : index
    %c0_45 = arith.constant 0 : index
    %78 = vector.load %arg15[%c0_44, %c0_45] : memref<1x64xf32, #tpu.memory_space<vmem>>, vector<1x64xf32>
    %79 = vector.broadcast %78 : vector<1x64xf32> to vector<16x64xf32>
    %80 = arith.addf %77, %79 : vector<16x64xf32>
    %c0_46 = arith.constant 0 : index
    %c0_47 = arith.constant 0 : index
    %81 = vector.load %arg16[%c0_46, %c0_47] : memref<32x64xbf16, #tpu.memory_space<vmem>>, vector<32x64xbf16>
    %cst_48 = arith.constant dense<0.000000e+00> : vector<16x64xf32>
    %82 = tpu.matmul %69, %81, %cst_48 {dimension_numbers = #tpu.dot_dimension_numbers<[1], [0], [0], [1], [0, 0, 1, 1], [], []>} : vector<16x32xbf16>, vector<32x64xbf16>, vector<16x64xf32> -> vector<16x64xf32>
    %c0_49 = arith.constant 0 : index
    %c0_50 = arith.constant 0 : index
    %83 = vector.load %arg17[%c0_49, %c0_50] : memref<32x64xbf16, #tpu.memory_space<vmem>>, vector<32x64xbf16>
    %cst_51 = arith.constant dense<0.000000e+00> : vector<16x64xf32>
    %84 = tpu.matmul %72, %83, %cst_51 {dimension_numbers = #tpu.dot_dimension_numbers<[1], [0], [0], [1], [0, 0, 1, 1], [], []>} : vector<16x32xbf16>, vector<32x64xbf16>, vector<16x64xf32> -> vector<16x64xf32>
    %85 = arith.addf %82, %84 : vector<16x64xf32>
    %c0_52 = arith.constant 0 : index
    %c0_53 = arith.constant 0 : index
    %86 = vector.load %arg18[%c0_52, %c0_53] : memref<1x64xf32, #tpu.memory_space<vmem>>, vector<1x64xf32>
    %87 = vector.broadcast %86 : vector<1x64xf32> to vector<16x64xf32>
    %88 = arith.addf %85, %87 : vector<16x64xf32>
    %89 = vector.shape_cast %80 : vector<16x64xf32> to vector<2x8x64xf32>
    %90 = vector.shape_cast %88 : vector<16x64xf32> to vector<2x8x64xf32>
    %91 = vector.extract_strided_slice %89 {offsets = [0, 0, 0], sizes = [1, 8, 64], strides = [1, 1, 1]} : vector<2x8x64xf32> to vector<1x8x64xf32>
    %92 = vector.shape_cast %91 : vector<1x8x64xf32> to vector<8x64xf32>
    %c0_54 = arith.constant 0 : index
    %c0_55 = arith.constant 0 : index
    %c0_56 = arith.constant 0 : index
    %93 = vector.load %arg19[%c0_54, %c0_55, %c0_56] : memref<8x2x64xf32, #tpu.memory_space<vmem>>, vector<8x1x64xf32>
    %94 = vector.shape_cast %93 : vector<8x1x64xf32> to vector<8x64xf32>
    %95 = vector.shape_cast %92 : vector<8x64xf32> to vector<8x1x64xf32>
    tpu.vector_store %arg19[%c0_54, %c0_55, %c0_56], %95 {strides = array<i32>} : memref<8x2x64xf32, #tpu.memory_space<vmem>>, vector<8x1x64xf32>,
    %96 = vector.extract_strided_slice %90 {offsets = [0, 0, 0], sizes = [1, 8, 64], strides = [1, 1, 1]} : vector<2x8x64xf32> to vector<1x8x64xf32>
    %97 = vector.shape_cast %96 : vector<1x8x64xf32> to vector<8x64xf32>
    %c0_57 = arith.constant 0 : index
    %c0_58 = arith.constant 0 : index
    %c0_59 = arith.constant 0 : index
    %98 = vector.load %arg20[%c0_57, %c0_58, %c0_59] : memref<8x2x64xf32, #tpu.memory_space<vmem>>, vector<8x1x64xf32>
    %99 = vector.shape_cast %98 : vector<8x1x64xf32> to vector<8x64xf32>
    %100 = vector.shape_cast %97 : vector<8x64xf32> to vector<8x1x64xf32>
    tpu.vector_store %arg20[%c0_57, %c0_58, %c0_59], %100 {strides = array<i32>} : memref<8x2x64xf32, #tpu.memory_space<vmem>>, vector<8x1x64xf32>,
    %101 = vector.extract_strided_slice %89 {offsets = [1, 0, 0], sizes = [1, 8, 64], strides = [1, 1, 1]} : vector<2x8x64xf32> to vector<1x8x64xf32>
    %102 = vector.shape_cast %101 : vector<1x8x64xf32> to vector<8x64xf32>
    %c0_60 = arith.constant 0 : index
    %c1 = arith.constant 1 : index
    %c0_61 = arith.constant 0 : index
    %103 = vector.load %arg19[%c0_60, %c1, %c0_61] : memref<8x2x64xf32, #tpu.memory_space<vmem>>, vector<8x1x64xf32>
    %104 = vector.shape_cast %103 : vector<8x1x64xf32> to vector<8x64xf32>
    %105 = vector.shape_cast %102 : vector<8x64xf32> to vector<8x1x64xf32>
    tpu.vector_store %arg19[%c0_60, %c1, %c0_61], %105 {strides = array<i32>} : memref<8x2x64xf32, #tpu.memory_space<vmem>>, vector<8x1x64xf32>,
    %106 = vector.extract_strided_slice %90 {offsets = [1, 0, 0], sizes = [1, 8, 64], strides = [1, 1, 1]} : vector<2x8x64xf32> to vector<1x8x64xf32>
    %107 = vector.shape_cast %106 : vector<1x8x64xf32> to vector<8x64xf32>
    %c0_62 = arith.constant 0 : index
    %c1_63 = arith.constant 1 : index
    %c0_64 = arith.constant 0 : index
    %108 = vector.load %arg20[%c0_62, %c1_63, %c0_64] : memref<8x2x64xf32, #tpu.memory_space<vmem>>, vector<8x1x64xf32>
    %109 = vector.shape_cast %108 : vector<8x1x64xf32> to vector<8x64xf32>
    %110 = vector.shape_cast %107 : vector<8x64xf32> to vector<8x1x64xf32>
    tpu.vector_store %arg20[%c0_62, %c1_63, %c0_64], %110 {strides = array<i32>} : memref<8x2x64xf32, #tpu.memory_space<vmem>>, vector<8x1x64xf32>,
    return
  }
  func.func @transform_0(%arg0: i32) -> (i32, i32, i32) {
    %c0_i32 = arith.constant 0 : i32
    %c0_i32_0 = arith.constant 0 : i32
    %c0_i32_1 = arith.constant 0 : i32
    return %arg0, %c0_i32, %c0_i32_0 : i32, i32, i32
  }
  func.func @transform_1(%arg0: i32) -> (i32, i32) {
    %c0_i32 = arith.constant 0 : i32
    %c0_i32_0 = arith.constant 0 : i32
    return %arg0, %c0_i32 : i32, i32
  }
  func.func @transform_2(%arg0: i32) -> (i32, i32) {
    %c0_i32 = arith.constant 0 : i32
    %c0_i32_0 = arith.constant 0 : i32
    %c0_i32_1 = arith.constant 0 : i32
    return %c0_i32, %c0_i32_0 : i32, i32
  }
  func.func @transform_3(%arg0: i32) -> (i32, i32) {
    %c0_i32 = arith.constant 0 : i32
    %c0_i32_0 = arith.constant 0 : i32
    %c0_i32_1 = arith.constant 0 : i32
    return %c0_i32, %c0_i32_0 : i32, i32
  }
  func.func @transform_4(%arg0: i32) -> (i32, i32) {
    %c0_i32 = arith.constant 0 : i32
    %c0_i32_0 = arith.constant 0 : i32
    %c0_i32_1 = arith.constant 0 : i32
    return %c0_i32, %c0_i32_0 : i32, i32
  }
  func.func @transform_5(%arg0: i32) -> (i32, i32) {
    %c0_i32 = arith.constant 0 : i32
    %c0_i32_0 = arith.constant 0 : i32
    %c0_i32_1 = arith.constant 0 : i32
    return %c0_i32, %c0_i32_0 : i32, i32
  }
  func.func @transform_6(%arg0: i32) -> (i32, i32) {
    %c0_i32 = arith.constant 0 : i32
    %c0_i32_0 = arith.constant 0 : i32
    %c0_i32_1 = arith.constant 0 : i32
    return %c0_i32, %c0_i32_0 : i32, i32
  }
  func.func @transform_7(%arg0: i32) -> (i32, i32) {
    %c0_i32 = arith.constant 0 : i32
    %c0_i32_0 = arith.constant 0 : i32
    %c0_i32_1 = arith.constant 0 : i32
    return %c0_i32, %c0_i32_0 : i32, i32
  }
  func.func @transform_8(%arg0: i32) -> (i32, i32) {
    %c0_i32 = arith.constant 0 : i32
    %c0_i32_0 = arith.constant 0 : i32
    %c0_i32_1 = arith.constant 0 : i32
    return %c0_i32, %c0_i32_0 : i32, i32
  }
  func.func @transform_9(%arg0: i32) -> (i32, i32) {
    %c0_i32 = arith.constant 0 : i32
    %c0_i32_0 = arith.constant 0 : i32
    %c0_i32_1 = arith.constant 0 : i32
    return %c0_i32, %c0_i32_0 : i32, i32
  }
  func.func @transform_10(%arg0: i32) -> (i32, i32) {
    %c0_i32 = arith.constant 0 : i32
    %c0_i32_0 = arith.constant 0 : i32
    %c0_i32_1 = arith.constant 0 : i32
    return %c0_i32, %c0_i32_0 : i32, i32
  }
  func.func @transform_11(%arg0: i32) -> (i32, i32) {
    %c0_i32 = arith.constant 0 : i32
    %c0_i32_0 = arith.constant 0 : i32
    %c0_i32_1 = arith.constant 0 : i32
    return %c0_i32, %c0_i32_0 : i32, i32
  }
  func.func @transform_12(%arg0: i32) -> (i32, i32) {
    %c0_i32 = arith.constant 0 : i32
    %c0_i32_0 = arith.constant 0 : i32
    %c0_i32_1 = arith.constant 0 : i32
    return %c0_i32, %c0_i32_0 : i32, i32
  }
  func.func @transform_13(%arg0: i32) -> (i32, i32) {
    %c0_i32 = arith.constant 0 : i32
    %c0_i32_0 = arith.constant 0 : i32
    %c0_i32_1 = arith.constant 0 : i32
    return %c0_i32, %c0_i32_0 : i32, i32
  }
  func.func @transform_14(%arg0: i32) -> (i32, i32) {
    %c0_i32 = arith.constant 0 : i32
    %c0_i32_0 = arith.constant 0 : i32
    %c0_i32_1 = arith.constant 0 : i32
    return %c0_i32, %c0_i32_0 : i32, i32
  }
  func.func @transform_15(%arg0: i32) -> (i32, i32) {
    %c0_i32 = arith.constant 0 : i32
    %c0_i32_0 = arith.constant 0 : i32
    %c0_i32_1 = arith.constant 0 : i32
    return %c0_i32, %c0_i32_0 : i32, i32
  }
  func.func @transform_16(%arg0: i32) -> (i32, i32) {
    %c0_i32 = arith.constant 0 : i32
    %c0_i32_0 = arith.constant 0 : i32
    %c0_i32_1 = arith.constant 0 : i32
    return %c0_i32, %c0_i32_0 : i32, i32
  }
  func.func @transform_17(%arg0: i32) -> (i32, i32) {
    %c0_i32 = arith.constant 0 : i32
    %c0_i32_0 = arith.constant 0 : i32
    %c0_i32_1 = arith.constant 0 : i32
    return %c0_i32, %c0_i32_0 : i32, i32
  }
  func.func @transform_18(%arg0: i32) -> (i32, i32, i32) {
    %c0_i32 = arith.constant 0 : i32
    %c0_i32_0 = arith.constant 0 : i32
    %c0_i32_1 = arith.constant 0 : i32
    return %c0_i32, %arg0, %c0_i32_0 : i32, i32, i32
  }
  func.func @transform_19(%arg0: i32) -> (i32, i32, i32) {
    %c0_i32 = arith.constant 0 : i32
    %c0_i32_0 = arith.constant 0 : i32
    %c0_i32_1 = arith.constant 0 : i32
    return %c0_i32, %arg0, %c0_i32_0 : i32, i32, i32
  }
}

module attributes {stable_mosaic.version = 11 : i64} {
  func.func @bilstm_kernel(%arg0: i32, %arg1: memref<8x2x64xf32, #tpu.memory_space<vmem>>, %arg2: memref<8x2x64xf32, #tpu.memory_space<vmem>>, %arg3: memref<8x2x1xf32, #tpu.memory_space<vmem>>, %arg4: memref<16x64xbf16, #tpu.memory_space<vmem>>, %arg5: memref<16x64xbf16, #tpu.memory_space<vmem>>, %arg6: memref<8x2x16xf32, #tpu.memory_space<vmem>>, %arg7: memref<8x2x16xf32, #tpu.memory_space<vmem>>) attributes {dimension_semantics = [#tpu.dimension_semantics<parallel>], iteration_bounds = array<i64: 1>, scalar_prefetch = 0 : i64, scratch_operands = 0 : i64, tpu.core_type = #tpu.core_type<tc>, window_params = [{transform_indices = @transform_0, window_bounds = array<i64: 8, 2, 64>}, {transform_indices = @transform_1, window_bounds = array<i64: 8, 2, 64>}, {transform_indices = @transform_2, window_bounds = array<i64: 8, 2, 1>}, {pipeline_mode = #tpu.pipeline_mode<synchronous>, transform_indices = @transform_3, window_bounds = array<i64: 16, 64>}, {pipeline_mode = #tpu.pipeline_mode<synchronous>, transform_indices = @transform_4, window_bounds = array<i64: 16, 64>}, {transform_indices = @transform_5, window_bounds = array<i64: 8, 2, 16>}, {transform_indices = @transform_6, window_bounds = array<i64: 8, 2, 16>}]} {
    %c0 = arith.constant 0 : index
    %c0_0 = arith.constant 0 : index
    %0 = vector.load %arg4[%c0, %c0_0] : memref<16x64xbf16, #tpu.memory_space<vmem>>, vector<16x64xbf16>
    %c0_1 = arith.constant 0 : index
    %c0_2 = arith.constant 0 : index
    %1 = vector.load %arg5[%c0_1, %c0_2] : memref<16x64xbf16, #tpu.memory_space<vmem>>, vector<16x64xbf16>
    %cst = arith.constant 0.000000e+00 : f32
    %2 = vector.broadcast %cst : f32 to vector<2x16xf32>
    %c0_i32 = arith.constant 0 : i32
    %c8_i32 = arith.constant 8 : i32
    %3 = arith.addi %c0_i32, %c8_i32 : i32
    %c1_i32 = arith.constant 1 : i32
    %4:2 = scf.for %arg8 = %c0_i32 to %3 step %c1_i32 iter_args(%arg9 = %2, %arg10 = %2) -> (vector<2x16xf32>, vector<2x16xf32>)  : i32 {
      %7 = arith.index_cast %arg8 : i32 to index
      %c0_8 = arith.constant 0 : index
      %c0_9 = arith.constant 0 : index
      %8 = vector.load %arg3[%7, %c0_8, %c0_9] : memref<8x2x1xf32, #tpu.memory_space<vmem>>, vector<1x2x1xf32>
      %9 = vector.shape_cast %8 : vector<1x2x1xf32> to vector<2x1xf32>
      %cst_10 = arith.constant 5.000000e-01 : f32
      %10 = vector.broadcast %cst_10 : f32 to vector<2x1xf32>
      %11 = arith.cmpf ogt, %9, %10 : vector<2x1xf32>
      %12 = arith.index_cast %arg8 : i32 to index
      %c0_11 = arith.constant 0 : index
      %c0_12 = arith.constant 0 : index
      %13 = vector.load %arg1[%12, %c0_11, %c0_12] : memref<8x2x64xf32, #tpu.memory_space<vmem>>, vector<1x2x64xf32>
      %14 = vector.shape_cast %13 : vector<1x2x64xf32> to vector<2x64xf32>
      %15 = arith.truncf %arg9 : vector<2x16xf32> to vector<2x16xbf16>
      %cst_13 = arith.constant dense<0.000000e+00> : vector<2x64xf32>
      %16 = tpu.matmul %15, %0, %cst_13 {dimension_numbers = #tpu.dot_dimension_numbers<[1], [0], [0], [1], [0, 0, 1, 1], [], []>} : vector<2x16xbf16>, vector<16x64xbf16>, vector<2x64xf32> -> vector<2x64xf32>
      %17 = arith.addf %14, %16 : vector<2x64xf32>
      %18 = vector.extract_strided_slice %17 {offsets = [0, 0], sizes = [2, 16], strides = [1, 1]} : vector<2x64xf32> to vector<2x16xf32>
      %19 = arith.negf %18 : vector<2x16xf32>
      %20 = math.exp %19 : vector<2x16xf32>
      %cst_14 = arith.constant 1.000000e+00 : f32
      %21 = vector.broadcast %cst_14 : f32 to vector<2x16xf32>
      %22 = arith.addf %21, %20 : vector<2x16xf32>
      %23 = arith.divf %21, %22 : vector<2x16xf32>
      %24 = vector.extract_strided_slice %17 {offsets = [0, 16], sizes = [2, 16], strides = [1, 1]} : vector<2x64xf32> to vector<2x16xf32>
      %25 = arith.negf %24 : vector<2x16xf32>
      %26 = math.exp %25 : vector<2x16xf32>
      %cst_15 = arith.constant 1.000000e+00 : f32
      %27 = vector.broadcast %cst_15 : f32 to vector<2x16xf32>
      %28 = arith.addf %27, %26 : vector<2x16xf32>
      %29 = arith.divf %27, %28 : vector<2x16xf32>
      %30 = vector.extract_strided_slice %17 {offsets = [0, 32], sizes = [2, 16], strides = [1, 1]} : vector<2x64xf32> to vector<2x16xf32>
      %31 = math.tanh %30 : vector<2x16xf32>
      %32 = vector.extract_strided_slice %17 {offsets = [0, 48], sizes = [2, 16], strides = [1, 1]} : vector<2x64xf32> to vector<2x16xf32>
      %33 = arith.negf %32 : vector<2x16xf32>
      %34 = math.exp %33 : vector<2x16xf32>
      %cst_16 = arith.constant 1.000000e+00 : f32
      %35 = vector.broadcast %cst_16 : f32 to vector<2x16xf32>
      %36 = arith.addf %35, %34 : vector<2x16xf32>
      %37 = arith.divf %35, %36 : vector<2x16xf32>
      %38 = arith.mulf %29, %arg10 : vector<2x16xf32>
      %39 = arith.mulf %23, %31 : vector<2x16xf32>
      %40 = arith.addf %38, %39 : vector<2x16xf32>
      %41 = math.tanh %40 : vector<2x16xf32>
      %42 = arith.mulf %37, %41 : vector<2x16xf32>
      %cst_17 = arith.constant 0.000000e+00 : f32
      %43 = vector.shape_cast %11 : vector<2x1xi1> to vector<2x1xi1>
      %44 = vector.broadcast %43 : vector<2x1xi1> to vector<2x16xi1>
      %45 = vector.broadcast %cst_17 : f32 to vector<2x16xf32>
      %46 = arith.select %44, %42, %45 : vector<2x16xi1>, vector<2x16xf32>
      %47 = arith.index_cast %arg8 : i32 to index
      %c0_18 = arith.constant 0 : index
      %c0_19 = arith.constant 0 : index
      %48 = vector.load %arg6[%47, %c0_18, %c0_19] : memref<8x2x16xf32, #tpu.memory_space<vmem>>, vector<1x2x16xf32>
      %49 = vector.shape_cast %48 : vector<1x2x16xf32> to vector<2x16xf32>
      %50 = vector.shape_cast %46 : vector<2x16xf32> to vector<1x2x16xf32>
      tpu.vector_store %arg6[%47, %c0_18, %c0_19], %50 {strides = array<i32>} : memref<8x2x16xf32, #tpu.memory_space<vmem>>, vector<1x2x16xf32>,
      %51 = vector.shape_cast %11 : vector<2x1xi1> to vector<2x1xi1>
      %52 = vector.broadcast %51 : vector<2x1xi1> to vector<2x16xi1>
      %53 = arith.select %52, %42, %arg9 : vector<2x16xi1>, vector<2x16xf32>
      %54 = vector.shape_cast %11 : vector<2x1xi1> to vector<2x1xi1>
      %55 = vector.broadcast %54 : vector<2x1xi1> to vector<2x16xi1>
      %56 = arith.select %55, %40, %arg10 : vector<2x16xi1>, vector<2x16xf32>
      scf.yield %53, %56 : vector<2x16xf32>, vector<2x16xf32>
    }
    %c8_i32_3 = arith.constant 8 : i32
    %c0_i32_4 = arith.constant 0 : i32
    %c8_i32_5 = arith.constant 8 : i32
    %5 = arith.addi %c0_i32_4, %c8_i32_5 : i32
    %c1_i32_6 = arith.constant 1 : i32
    %6:2 = scf.for %arg8 = %c0_i32_4 to %5 step %c1_i32_6 iter_args(%arg9 = %2, %arg10 = %2) -> (vector<2x16xf32>, vector<2x16xf32>)  : i32 {
      %c7_i32 = arith.constant 7 : i32
      %7 = arith.subi %c7_i32, %arg8 : i32
      %8 = arith.index_cast %7 : i32 to index
      %c0_8 = arith.constant 0 : index
      %c0_9 = arith.constant 0 : index
      %9 = vector.load %arg3[%8, %c0_8, %c0_9] : memref<8x2x1xf32, #tpu.memory_space<vmem>>, vector<1x2x1xf32>
      %10 = vector.shape_cast %9 : vector<1x2x1xf32> to vector<2x1xf32>
      %cst_10 = arith.constant 5.000000e-01 : f32
      %11 = vector.broadcast %cst_10 : f32 to vector<2x1xf32>
      %12 = arith.cmpf ogt, %10, %11 : vector<2x1xf32>
      %13 = arith.index_cast %7 : i32 to index
      %c0_11 = arith.constant 0 : index
      %c0_12 = arith.constant 0 : index
      %14 = vector.load %arg2[%13, %c0_11, %c0_12] : memref<8x2x64xf32, #tpu.memory_space<vmem>>, vector<1x2x64xf32>
      %15 = vector.shape_cast %14 : vector<1x2x64xf32> to vector<2x64xf32>
      %16 = arith.truncf %arg9 : vector<2x16xf32> to vector<2x16xbf16>
      %cst_13 = arith.constant dense<0.000000e+00> : vector<2x64xf32>
      %17 = tpu.matmul %16, %1, %cst_13 {dimension_numbers = #tpu.dot_dimension_numbers<[1], [0], [0], [1], [0, 0, 1, 1], [], []>} : vector<2x16xbf16>, vector<16x64xbf16>, vector<2x64xf32> -> vector<2x64xf32>
      %18 = arith.addf %15, %17 : vector<2x64xf32>
      %19 = vector.extract_strided_slice %18 {offsets = [0, 0], sizes = [2, 16], strides = [1, 1]} : vector<2x64xf32> to vector<2x16xf32>
      %20 = arith.negf %19 : vector<2x16xf32>
      %21 = math.exp %20 : vector<2x16xf32>
      %cst_14 = arith.constant 1.000000e+00 : f32
      %22 = vector.broadcast %cst_14 : f32 to vector<2x16xf32>
      %23 = arith.addf %22, %21 : vector<2x16xf32>
      %24 = arith.divf %22, %23 : vector<2x16xf32>
      %25 = vector.extract_strided_slice %18 {offsets = [0, 16], sizes = [2, 16], strides = [1, 1]} : vector<2x64xf32> to vector<2x16xf32>
      %26 = arith.negf %25 : vector<2x16xf32>
      %27 = math.exp %26 : vector<2x16xf32>
      %cst_15 = arith.constant 1.000000e+00 : f32
      %28 = vector.broadcast %cst_15 : f32 to vector<2x16xf32>
      %29 = arith.addf %28, %27 : vector<2x16xf32>
      %30 = arith.divf %28, %29 : vector<2x16xf32>
      %31 = vector.extract_strided_slice %18 {offsets = [0, 32], sizes = [2, 16], strides = [1, 1]} : vector<2x64xf32> to vector<2x16xf32>
      %32 = math.tanh %31 : vector<2x16xf32>
      %33 = vector.extract_strided_slice %18 {offsets = [0, 48], sizes = [2, 16], strides = [1, 1]} : vector<2x64xf32> to vector<2x16xf32>
      %34 = arith.negf %33 : vector<2x16xf32>
      %35 = math.exp %34 : vector<2x16xf32>
      %cst_16 = arith.constant 1.000000e+00 : f32
      %36 = vector.broadcast %cst_16 : f32 to vector<2x16xf32>
      %37 = arith.addf %36, %35 : vector<2x16xf32>
      %38 = arith.divf %36, %37 : vector<2x16xf32>
      %39 = arith.mulf %30, %arg10 : vector<2x16xf32>
      %40 = arith.mulf %24, %32 : vector<2x16xf32>
      %41 = arith.addf %39, %40 : vector<2x16xf32>
      %42 = math.tanh %41 : vector<2x16xf32>
      %43 = arith.mulf %38, %42 : vector<2x16xf32>
      %cst_17 = arith.constant 0.000000e+00 : f32
      %44 = vector.shape_cast %12 : vector<2x1xi1> to vector<2x1xi1>
      %45 = vector.broadcast %44 : vector<2x1xi1> to vector<2x16xi1>
      %46 = vector.broadcast %cst_17 : f32 to vector<2x16xf32>
      %47 = arith.select %45, %43, %46 : vector<2x16xi1>, vector<2x16xf32>
      %48 = arith.index_cast %7 : i32 to index
      %c0_18 = arith.constant 0 : index
      %c0_19 = arith.constant 0 : index
      %49 = vector.load %arg7[%48, %c0_18, %c0_19] : memref<8x2x16xf32, #tpu.memory_space<vmem>>, vector<1x2x16xf32>
      %50 = vector.shape_cast %49 : vector<1x2x16xf32> to vector<2x16xf32>
      %51 = vector.shape_cast %47 : vector<2x16xf32> to vector<1x2x16xf32>
      tpu.vector_store %arg7[%48, %c0_18, %c0_19], %51 {strides = array<i32>} : memref<8x2x16xf32, #tpu.memory_space<vmem>>, vector<1x2x16xf32>,
      %52 = vector.shape_cast %12 : vector<2x1xi1> to vector<2x1xi1>
      %53 = vector.broadcast %52 : vector<2x1xi1> to vector<2x16xi1>
      %54 = arith.select %53, %43, %arg9 : vector<2x16xi1>, vector<2x16xf32>
      %55 = vector.shape_cast %12 : vector<2x1xi1> to vector<2x1xi1>
      %56 = vector.broadcast %55 : vector<2x1xi1> to vector<2x16xi1>
      %57 = arith.select %56, %41, %arg10 : vector<2x16xi1>, vector<2x16xf32>
      scf.yield %54, %57 : vector<2x16xf32>, vector<2x16xf32>
    }
    %c8_i32_7 = arith.constant 8 : i32
    return
  }
  func.func @transform_0(%arg0: i32) -> (i32, i32, i32) {
    %c0_i32 = arith.constant 0 : i32
    %c0_i32_0 = arith.constant 0 : i32
    %c0_i32_1 = arith.constant 0 : i32
    return %c0_i32, %arg0, %c0_i32_0 : i32, i32, i32
  }
  func.func @transform_1(%arg0: i32) -> (i32, i32, i32) {
    %c0_i32 = arith.constant 0 : i32
    %c0_i32_0 = arith.constant 0 : i32
    %c0_i32_1 = arith.constant 0 : i32
    return %c0_i32, %arg0, %c0_i32_0 : i32, i32, i32
  }
  func.func @transform_2(%arg0: i32) -> (i32, i32, i32) {
    %c0_i32 = arith.constant 0 : i32
    %c0_i32_0 = arith.constant 0 : i32
    %c0_i32_1 = arith.constant 0 : i32
    return %c0_i32, %arg0, %c0_i32_0 : i32, i32, i32
  }
  func.func @transform_3(%arg0: i32) -> (i32, i32) {
    %c0_i32 = arith.constant 0 : i32
    %c0_i32_0 = arith.constant 0 : i32
    %c0_i32_1 = arith.constant 0 : i32
    return %c0_i32, %c0_i32_0 : i32, i32
  }
  func.func @transform_4(%arg0: i32) -> (i32, i32) {
    %c0_i32 = arith.constant 0 : i32
    %c0_i32_0 = arith.constant 0 : i32
    %c0_i32_1 = arith.constant 0 : i32
    return %c0_i32, %c0_i32_0 : i32, i32
  }
  func.func @transform_5(%arg0: i32) -> (i32, i32, i32) {
    %c0_i32 = arith.constant 0 : i32
    %c0_i32_0 = arith.constant 0 : i32
    %c0_i32_1 = arith.constant 0 : i32
    return %c0_i32, %arg0, %c0_i32_0 : i32, i32, i32
  }
  func.func @transform_6(%arg0: i32) -> (i32, i32, i32) {
    %c0_i32 = arith.constant 0 : i32
    %c0_i32_0 = arith.constant 0 : i32
    %c0_i32_1 = arith.constant 0 : i32
    return %c0_i32, %arg0, %c0_i32_0 : i32, i32, i32
  }
}

</mosaic_0001>

<llo_original>
// kernel: self_attention_bidaf.3
$region0: #{self_attention_bidaf.3}
  #allocation0 [shape = 'u32[]', space=smem, size = 0x4, offset = 0x4, fixed_abs, tag = 'smem constant byte address 0x4 - core index']
  #allocation1 [shape = 'u32[72,128]{1,0:T(1,128)}', space=vmem, size = 0x9000, scoped, tag = 'internal scratch']
  %s0 = inlined_call_operand.vmem [shape: f32[8,2,64], index: 0, kind: input, shape index: {}]
  %s1 = inlined_call_operand.vmem [shape: f32[8,2,64], index: 1, kind: input, shape index: {}]
  %s2 = inlined_call_operand.vmem [shape: f32[8,2,1], index: 2, kind: input, shape index: {}]
  %s3 = inlined_call_operand.vmem [shape: bf16[16,64], index: 3, kind: input, shape index: {}]
  %s4 = inlined_call_operand.vmem [shape: bf16[16,64], index: 4, kind: input, shape index: {}]
  %s5 = inlined_call_operand.vmem [shape: f32[8,2,16], index: 5, kind: output, shape index: {0}]
  %s6 = inlined_call_operand.vmem [shape: f32[8,2,16], index: 6, kind: output, shape index: {1}]
  %7 = xla_tuple %s5, %s6
  %s8 = sld [smem:[#allocation0]]
  $region52: #{self_attention_bidaf.3} parent=0
    _
  %s10 = ssub.s32 1, %s8
  %s11 = scalar_select 0, %s10, %s8
  // Predicated region
  $region2: #{self_attention_bidaf.3} parent=0 // pred_check
    _
  $region3: #{self_attention_bidaf.3} parent=0 // pred_check_branch
    %13 = sbr.rel (0) target = $region5
  $region4: #{self_attention_bidaf.3} parent=0 // pred_region
    _
  $region5: #{self_attention_bidaf.3} parent=0 // pred_fallthru
    _
  // Predicated region
  $region6: #{self_attention_bidaf.3} parent=0 // pred_check
    _
  $region7: #{self_attention_bidaf.3} parent=0 // pred_check_branch
    %15 = sbr.rel (0) target = $region9
  $region8: #{self_attention_bidaf.3} parent=0 // pred_region
    _
  $region9: #{self_attention_bidaf.3} parent=0 // pred_fallthru
    _
  // Predicated region
  $region10: #{self_attention_bidaf.3} parent=0 // pred_check
    _
  $region11: #{self_attention_bidaf.3} parent=0 // pred_check_branch
    %17 = sbr.rel (0) target = $region13
  $region12: #{self_attention_bidaf.3} parent=0 // pred_region
    _
  $region13: #{self_attention_bidaf.3} parent=0 // pred_fallthru
    _
  // Predicated region
  $region14: #{self_attention_bidaf.3} parent=0 // pred_check
    _
  $region15: #{self_attention_bidaf.3} parent=0 // pred_check_branch
    %19 = sbr.rel (0) target = $region17
  $region16: #{self_attention_bidaf.3} parent=0 // pred_region
    _
  $region17: #{self_attention_bidaf.3} parent=0 // pred_fallthru
    _
  // Predicated region
  $region18: #{self_attention_bidaf.3} parent=0 // pred_check
    _
  $region19: #{self_attention_bidaf.3} parent=0 // pred_check_branch
    %21 = sbr.rel (0) target = $region21
  $region20: #{self_attention_bidaf.3} parent=0 // pred_region
    _
  $region21: #{self_attention_bidaf.3} parent=0 // pred_fallthru
    _
  %v23 = vld [vmem:[%s3] sm:$0xf]
  %v24 = vld [vmem:[%s3 + $0x4] sm:$0xf]
  %v25 = vld [vmem:[%s4] sm:$0xf]
  %v26 = vld [vmem:[%s4 + $0x4] sm:$0xf]
  loop: start=0, step=1, limit=8
  $region22: #{self_attention_bidaf.3} parent=0 // loop_pre_header
    _
  $region23: #{self_attention_bidaf.3} parent=0 // loop_header
    %s28 = sphi 0, %s32
    %p29 = scmp.ge.s32.totalorder %s28, 8
    %v33 = vphi 0.0, %v119
    %v34 = vphi 0.0, %v120
  $region24: #{self_attention_bidaf.3} parent=0 // loop_header_branch
    %31 = sbr.rel (%p29) target = $region28
  $region25: #{self_attention_bidaf.3} parent=0 // loop_body
    %s35 = smul.u32 %s28, 2
    %s36 = scalar_lea.vmem %s2, %s35
    %v37 = vld [vmem:[%s36] sm:$0x3]
    %vm38 = vcmp.gt.f32.partialorder %v37, 0.5
    %s39 = scalar_lea.vmem %s0, %s35
    %v40 = vld [vmem:[%s39] sm:$0x3]
    %v41 = vpack.c.bf16 %v33, %v33
    %43 = vrot.lane.b32.xlu0 %v41, 80
    %v44 = vpop.permute.xlu0 %43
    %v47 = vunpack.c.l.b16 %v23
    %v48 = vunpack.c.l.b16 %v24
    %v49 = vpack.c.b16 %v48, %v47
    %vm51 = vcmask 130048
    %v53 = vsel %vm51, %v44, 0
    %55 = vmatpush.bf16.msra.mxu0 0
    %56 = vmatpush.bf16.msra.mxu0 0
    %57 = vmatpush.bf16.msra.mxu0 0
    %58 = vmatpush.bf16.msra.mxu0 0
    %59 = vmatpush.bf16.msra.mxu0 0
    %60 = vmatpush.bf16.msra.mxu0 0
    %61 = vmatpush.bf16.msra.mxu0 0
    %62 = vmatpush.bf16.msra.mxu0 %v49
    %63 = vmatmul.bf16.gmra.mxu0 %v53
    %v64 = vpop.f32.mrf.mxu0
    %v65 = vadd.f32 0.0, %v64
    %v66 = vpop.f32.mrf.mxu0
    %67 = vdwg.mxu0
    %v68 = vadd.f32 %v40, %v65
    %v69 = vxor.u32 %v68, 2147483648
    %v70 = vmul.f32 %v69, 1.442695
    %v71 = vpow.pop %v70
    %v72 = vadd.f32 %v71, 1.0
    %v73 = vrcp.pop %v72
    %v74 = vmul.f32 %v72, %v73
    %v75 = vsub.f32 1.0, %v74
    %v76 = vmul.f32 %v73, %v75
    %v77 = vadd.f32 %v73, %v76
    %vm78 = vweird.f32 %v72
    %vm79 = vweird.f32 %v73
    %vm80 = vmor %vm78, %vm79
    %v81 = vsel %vm80, %v73, %v77
    %v82 = vand.u32 2147483647, %v72
    %vm83 = vcmp.eq.f32.partialorder %v82, 8.507059e+37
    %v84 = vand.u32 %v72, 2147483648
    %v85 = vor.u32 1.1754944e-38, %v84
    %v86 = vsel %vm83, %v85, %v81
    %v87 = vmul.f32 1.0, %v86
    %v88 = vtanh.pop %v68
    %v89 = vmul.f32 %v87, %v34
    %91 = vrot.lane.b32.xlu0 %v88, 96
    %v92 = vpop.permute.xlu0 %91
    %v94 = vmul.f32 %v87, %v92
    %96 = vrot.lane.b32.xlu0 %v94, 16
    %v97 = vpop.permute.xlu0 %96
    %v99 = vadd.f32 %v89, %v97
    %v100 = vtanh.pop %v99
    %102 = vrot.lane.b32.xlu0 %v100, 32
    %v103 = vpop.permute.xlu0 %102
    %v105 = vmul.f32 %v87, %v103
    %v106 = vsel %vm38, 1, 0
    %107 = vset.pattern.permute.xlu0 0
    %108 = vperm.xlu0 %107, %v106
    %v109 = vpop.permute.xlu0 %108
    %vm110 = vcmp.eq.s32.totalorder %v109, 1
    %v111 = vsel %vm110, %v105, 0.0
    %113 = vrot.lane.b32.xlu0 %v111, 80
    %v114 = vpop.permute.xlu0 %113
    %s116 = scalar_lea.vmem %s5, %s35
    %vm117 = vcmask 123904
    %118 = vst.msk [vmem:[%s116] sm:$0x3] %vm117, %v114
    %v119 = vsel %vm110, %v105, %v33
    %v120 = vsel %vm110, %v99, %v34
  $region26: #{self_attention_bidaf.3} parent=0 // loop_footer
    %s32 = sadd.s32 1, %s28
  $region27: #{self_attention_bidaf.3} parent=0 // loop_footer_branch
    %27 = sbr.rel target = $region23
  $region28: #{self_attention_bidaf.3} parent=0 // loop_exit
    _
  loop: start=0, step=1, limit=8
  $region29: #{self_attention_bidaf.3} parent=0 // loop_pre_header
    _
  $region30: #{self_attention_bidaf.3} parent=0 // loop_header
    %s122 = sphi 0, %s126
    %p123 = scmp.ge.s32.totalorder %s122, 8
    %v127 = vphi 0.0, %v214
    %v128 = vphi 0.0, %v215
  $region31: #{self_attention_bidaf.3} parent=0 // loop_header_branch
    %125 = sbr.rel (%p123) target = $region35
  $region32: #{self_attention_bidaf.3} parent=0 // loop_body
    %s129 = ssub.s32 7, %s122
    %s130 = smul.u32 %s129, 2
    %s131 = scalar_lea.vmem %s2, %s130
    %v132 = vld [vmem:[%s131] sm:$0x3]
    %vm133 = vcmp.gt.f32.partialorder %v132, 0.5
    %s134 = scalar_lea.vmem %s1, %s130
    %v135 = vld [vmem:[%s134] sm:$0x3]
    %v136 = vpack.c.bf16 %v127, %v127
    %138 = vrot.lane.b32.xlu0 %v136, 80
    %v139 = vpop.permute.xlu0 %138
    %v142 = vunpack.c.l.b16 %v25
    %v143 = vunpack.c.l.b16 %v26
    %v144 = vpack.c.b16 %v143, %v142
    %vm146 = vcmask 130048
    %v148 = vsel %vm146, %v139, 0
    %150 = vmatpush.bf16.msra.mxu0 0
    %151 = vmatpush.bf16.msra.mxu0 0
    %152 = vmatpush.bf16.msra.mxu0 0
    %153 = vmatpush.bf16.msra.mxu0 0
    %154 = vmatpush.bf16.msra.mxu0 0
    %155 = vmatpush.bf16.msra.mxu0 0
    %156 = vmatpush.bf16.msra.mxu0 0
    %157 = vmatpush.bf16.msra.mxu0 %v144
    %158 = vmatmul.bf16.gmra.mxu0 %v148
    %v159 = vpop.f32.mrf.mxu0
    %v160 = vadd.f32 0.0, %v159
    %v161 = vpop.f32.mrf.mxu0
    %162 = vdwg.mxu0
    %v163 = vadd.f32 %v135, %v160
    %v164 = vxor.u32 %v163, 2147483648
    %v165 = vmul.f32 %v164, 1.442695
    %v166 = vpow.pop %v165
    %v167 = vadd.f32 %v166, 1.0
    %v168 = vrcp.pop %v167
    %v169 = vmul.f32 %v167, %v168
    %v170 = vsub.f32 1.0, %v169
    %v171 = vmul.f32 %v168, %v170
    %v172 = vadd.f32 %v168, %v171
    %vm173 = vweird.f32 %v167
    %vm174 = vweird.f32 %v168
    %vm175 = vmor %vm173, %vm174
    %v176 = vsel %vm175, %v168, %v172
    %v177 = vand.u32 2147483647, %v167
    %vm178 = vcmp.eq.f32.partialorder %v177, 8.507059e+37
    %v179 = vand.u32 %v167, 2147483648
    %v180 = vor.u32 1.1754944e-38, %v179
    %v181 = vsel %vm178, %v180, %v176
    %v182 = vmul.f32 1.0, %v181
    %v183 = vtanh.pop %v163
    %v184 = vmul.f32 %v182, %v128
    %186 = vrot.lane.b32.xlu0 %v183, 96
    %v187 = vpop.permute.xlu0 %186
    %v189 = vmul.f32 %v182, %v187
    %191 = vrot.lane.b32.xlu0 %v189, 16
    %v192 = vpop.permute.xlu0 %191
    %v194 = vadd.f32 %v184, %v192
    %v195 = vtanh.pop %v194
    %197 = vrot.lane.b32.xlu0 %v195, 32
    %v198 = vpop.permute.xlu0 %197
    %v200 = vmul.f32 %v182, %v198
    %v201 = vsel %vm133, 1, 0
    %202 = vset.pattern.permute.xlu0 0
    %203 = vperm.xlu0 %202, %v201
    %v204 = vpop.permute.xlu0 %203
    %vm205 = vcmp.eq.s32.totalorder %v204, 1
    %v206 = vsel %vm205, %v200, 0.0
    %208 = vrot.lane.b32.xlu0 %v206, 80
    %v209 = vpop.permute.xlu0 %208
    %s211 = scalar_lea.vmem %s6, %s130
    %vm212 = vcmask 123904
    %213 = vst.msk [vmem:[%s211] sm:$0x3] %vm212, %v209
    %v214 = vsel %vm205, %v200, %v127
    %v215 = vsel %vm205, %v194, %v128
  $region33: #{self_attention_bidaf.3} parent=0 // loop_footer
    %s126 = sadd.s32 1, %s122
  $region34: #{self_attention_bidaf.3} parent=0 // loop_footer_branch
    %121 = sbr.rel target = $region30
  $region35: #{self_attention_bidaf.3} parent=0 // loop_exit
    _
  // Predicated region
  $region36: #{self_attention_bidaf.3} parent=0 // pred_check
    _
  $region37: #{self_attention_bidaf.3} parent=0 // pred_check_branch
    %217 = sbr.rel (0) target = $region39
  $region38: #{self_attention_bidaf.3} parent=0 // pred_region
    _
  $region39: #{self_attention_bidaf.3} parent=0 // pred_fallthru
    _
  // Predicated region
  $region40: #{self_attention_bidaf.3} parent=0 // pred_check
    _
  $region41: #{self_attention_bidaf.3} parent=0 // pred_check_branch
    %219 = sbr.rel (0) target = $region43
  $region42: #{self_attention_bidaf.3} parent=0 // pred_region
    _
  $region43: #{self_attention_bidaf.3} parent=0 // pred_fallthru
    _
  // Predicated region
  $region44: #{self_attention_bidaf.3} parent=0 // pred_check
    _
  $region45: #{self_attention_bidaf.3} parent=0 // pred_check_branch
    %221 = sbr.rel (0) target = $region47
  $region46: #{self_attention_bidaf.3} parent=0 // pred_region
    _
  $region47: #{self_attention_bidaf.3} parent=0 // pred_fallthru
    _
  // Predicated region
  $region48: #{self_attention_bidaf.3} parent=0 // pred_check
    _
  $region49: #{self_attention_bidaf.3} parent=0 // pred_check_branch
    %223 = sbr.rel (0) target = $region51
  $region50: #{self_attention_bidaf.3} parent=0 // pred_region
    _
  $region51: #{self_attention_bidaf.3} parent=0 // pred_fallthru
    _

// kernel: self_attention_bidaf.2
$region0: #{self_attention_bidaf.2}
  #allocation0 [shape = 'u32[]', space=smem, size = 0x4, offset = 0x4, fixed_abs, tag = 'smem constant byte address 0x4 - core index']
  #allocation1 [shape = 'u32[72,128]{1,0:T(1,128)}', space=vmem, size = 0x9000, scoped, tag = 'internal scratch']
  %s0 = inlined_call_operand.vmem [shape: f32[2,8,32], index: 0, kind: input, shape index: {}]
  %s1 = inlined_call_operand.vmem [shape: f32[2,8], index: 1, kind: input, shape index: {}]
  %s2 = inlined_call_operand.vmem [shape: bf16[32,32], index: 2, kind: input, shape index: {}]
  %s3 = inlined_call_operand.vmem [shape: bf16[32,32], index: 3, kind: input, shape index: {}]
  %s4 = inlined_call_operand.vmem [shape: bf16[32,32], index: 4, kind: input, shape index: {}]
  %s5 = inlined_call_operand.vmem [shape: f32[1,32], index: 5, kind: input, shape index: {}]
  %s6 = inlined_call_operand.vmem [shape: f32[1,32], index: 6, kind: input, shape index: {}]
  %s7 = inlined_call_operand.vmem [shape: f32[1,32], index: 7, kind: input, shape index: {}]
  %s8 = inlined_call_operand.vmem [shape: bf16[32,32], index: 8, kind: input, shape index: {}]
  %s9 = inlined_call_operand.vmem [shape: f32[1,32], index: 9, kind: input, shape index: {}]
  %s10 = inlined_call_operand.vmem [shape: bf16[32,64], index: 10, kind: input, shape index: {}]
  %s11 = inlined_call_operand.vmem [shape: bf16[32,64], index: 11, kind: input, shape index: {}]
  %s12 = inlined_call_operand.vmem [shape: bf16[32,64], index: 12, kind: input, shape index: {}]
  %s13 = inlined_call_operand.vmem [shape: bf16[32,64], index: 13, kind: input, shape index: {}]
  %s14 = inlined_call_operand.vmem [shape: f32[1,64], index: 14, kind: input, shape index: {}]
  %s15 = inlined_call_operand.vmem [shape: bf16[32,64], index: 15, kind: input, shape index: {}]
  %s16 = inlined_call_operand.vmem [shape: bf16[32,64], index: 16, kind: input, shape index: {}]
  %s17 = inlined_call_operand.vmem [shape: f32[1,64], index: 17, kind: input, shape index: {}]
  %s18 = inlined_call_operand.vmem [shape: f32[8,2,64], index: 18, kind: output, shape index: {0}]
  %s19 = inlined_call_operand.vmem [shape: f32[8,2,64], index: 19, kind: output, shape index: {1}]
  %20 = xla_tuple %s18, %s19
  %s21 = sld [smem:[#allocation0]]
  $region90: #{self_attention_bidaf.2} parent=0
    _
  %s23 = ssub.s32 1, %s21
  %s24 = scalar_select 0, %s23, %s21
  // Predicated region
  $region2: #{self_attention_bidaf.2} parent=0 // pred_check
    _
  $region3: #{self_attention_bidaf.2} parent=0 // pred_check_branch
    %26 = sbr.rel (0) target = $region5
  $region4: #{self_attention_bidaf.2} parent=0 // pred_region
    _
  $region5: #{self_attention_bidaf.2} parent=0 // pred_fallthru
    _
  // Predicated region
  $region6: #{self_attention_bidaf.2} parent=0 // pred_check
    _
  $region7: #{self_attention_bidaf.2} parent=0 // pred_check_branch
    %28 = sbr.rel (0) target = $region9
  $region8: #{self_attention_bidaf.2} parent=0 // pred_region
    _
  $region9: #{self_attention_bidaf.2} parent=0 // pred_fallthru
    _
  // Predicated region
  $region10: #{self_attention_bidaf.2} parent=0 // pred_check
    _
  $region11: #{self_attention_bidaf.2} parent=0 // pred_check_branch
    %30 = sbr.rel (0) target = $region13
  $region12: #{self_attention_bidaf.2} parent=0 // pred_region
    _
  $region13: #{self_attention_bidaf.2} parent=0 // pred_fallthru
    _
  // Predicated region
  $region14: #{self_attention_bidaf.2} parent=0 // pred_check
    _
  $region15: #{self_attention_bidaf.2} parent=0 // pred_check_branch
    %32 = sbr.rel (0) target = $region17
  $region16: #{self_attention_bidaf.2} parent=0 // pred_region
    _
  $region17: #{self_attention_bidaf.2} parent=0 // pred_fallthru
    _
  // Predicated region
  $region18: #{self_attention_bidaf.2} parent=0 // pred_check
    _
  $region19: #{self_attention_bidaf.2} parent=0 // pred_check_branch
    %34 = sbr.rel (0) target = $region21
  $region20: #{self_attention_bidaf.2} parent=0 // pred_region
    _
  $region21: #{self_attention_bidaf.2} parent=0 // pred_fallthru
    _
  // Predicated region
  $region22: #{self_attention_bidaf.2} parent=0 // pred_check
    _
  $region23: #{self_attention_bidaf.2} parent=0 // pred_check_branch
    %36 = sbr.rel (0) target = $region25
  $region24: #{self_attention_bidaf.2} parent=0 // pred_region
    _
  $region25: #{self_attention_bidaf.2} parent=0 // pred_fallthru
    _
  // Predicated region
  $region26: #{self_attention_bidaf.2} parent=0 // pred_check
    _
  $region27: #{self_attention_bidaf.2} parent=0 // pred_check_branch
    %38 = sbr.rel (0) target = $region29
  $region28: #{self_attention_bidaf.2} parent=0 // pred_region
    _
  $region29: #{self_attention_bidaf.2} parent=0 // pred_fallthru
    _
  // Predicated region
  $region30: #{self_attention_bidaf.2} parent=0 // pred_check
    _
  $region31: #{self_attention_bidaf.2} parent=0 // pred_check_branch
    %40 = sbr.rel (0) target = $region33
  $region32: #{self_attention_bidaf.2} parent=0 // pred_region
    _
  $region33: #{self_attention_bidaf.2} parent=0 // pred_fallthru
    _
  // Predicated region
  $region34: #{self_attention_bidaf.2} parent=0 // pred_check
    _
  $region35: #{self_attention_bidaf.2} parent=0 // pred_check_branch
    %42 = sbr.rel (0) target = $region37
  $region36: #{self_attention_bidaf.2} parent=0 // pred_region
    _
  $region37: #{self_attention_bidaf.2} parent=0 // pred_fallthru
    _
  // Predicated region
  $region38: #{self_attention_bidaf.2} parent=0 // pred_check
    _
  $region39: #{self_attention_bidaf.2} parent=0 // pred_check_branch
    %44 = sbr.rel (0) target = $region41
  $region40: #{self_attention_bidaf.2} parent=0 // pred_region
    _
  $region41: #{self_attention_bidaf.2} parent=0 // pred_fallthru
    _
  // Predicated region
  $region42: #{self_attention_bidaf.2} parent=0 // pred_check
    _
  $region43: #{self_attention_bidaf.2} parent=0 // pred_check_branch
    %46 = sbr.rel (0) target = $region45
  $region44: #{self_attention_bidaf.2} parent=0 // pred_region
    _
  $region45: #{self_attention_bidaf.2} parent=0 // pred_fallthru
    _
  // Predicated region
  $region46: #{self_attention_bidaf.2} parent=0 // pred_check
    _
  $region47: #{self_attention_bidaf.2} parent=0 // pred_check_branch
    %48 = sbr.rel (0) target = $region49
  $region48: #{self_attention_bidaf.2} parent=0 // pred_region
    _
  $region49: #{self_attention_bidaf.2} parent=0 // pred_fallthru
    _
  // Predicated region
  $region50: #{self_attention_bidaf.2} parent=0 // pred_check
    _
  $region51: #{self_attention_bidaf.2} parent=0 // pred_check_branch
    %50 = sbr.rel (0) target = $region53
  $region52: #{self_attention_bidaf.2} parent=0 // pred_region
    _
  $region53: #{self_attention_bidaf.2} parent=0 // pred_fallthru
    _
  // Predicated region
  $region54: #{self_attention_bidaf.2} parent=0 // pred_check
    _
  $region55: #{self_attention_bidaf.2} parent=0 // pred_check_branch
    %52 = sbr.rel (0) target = $region57
  $region56: #{self_attention_bidaf.2} parent=0 // pred_region
    _
  $region57: #{self_attention_bidaf.2} parent=0 // pred_fallthru
    _
  // Predicated region
  $region58: #{self_attention_bidaf.2} parent=0 // pred_check
    _
  $region59: #{self_attention_bidaf.2} parent=0 // pred_check_branch
    %54 = sbr.rel (0) target = $region61
  $region60: #{self_attention_bidaf.2} parent=0 // pred_region
    _
  $region61: #{self_attention_bidaf.2} parent=0 // pred_fallthru
    _
  // Predicated region
  $region62: #{self_attention_bidaf.2} parent=0 // pred_check
    _
  $region63: #{self_attention_bidaf.2} parent=0 // pred_check_branch
    %56 = sbr.rel (0) target = $region65
  $region64: #{self_attention_bidaf.2} parent=0 // pred_region
    _
  $region65: #{self_attention_bidaf.2} parent=0 // pred_fallthru
    _
  // Predicated region
  $region66: #{self_attention_bidaf.2} parent=0 // pred_check
    _
  $region67: #{self_attention_bidaf.2} parent=0 // pred_check_branch
    %58 = sbr.rel (0) target = $region69
  $region68: #{self_attention_bidaf.2} parent=0 // pred_region
    _
  $region69: #{self_attention_bidaf.2} parent=0 // pred_fallthru
    _
  // Predicated region
  $region70: #{self_attention_bidaf.2} parent=0 // pred_check
    _
  $region71: #{self_attention_bidaf.2} parent=0 // pred_check_branch
    %60 = sbr.rel (0) target = $region73
  $region72: #{self_attention_bidaf.2} parent=0 // pred_region
    _
  $region73: #{self_attention_bidaf.2} parent=0 // pred_fallthru
    _
  %v62 = vld [vmem:[%s0] sm:$0xff]
  %v63 = vld [vmem:[%s0 + $0x8] sm:$0xff]
  %v64 = vld [vmem:[%s1] sm:$0x3]
  %v65 = vpack.c.bf16 %v63, %v62
  %v66 = vld [vmem:[%s2] sm:$0xf]
  %v67 = vld [vmem:[%s2 + $0x4] sm:$0xf]
  %v68 = vld [vmem:[%s2 + $0x8] sm:$0xf]
  %v69 = vld [vmem:[%s2 + $0xc] sm:$0xf]
  %v70 = vld [vmem:[%s5] sm:$0x1]
  %v72 = vperm.slane %v70, 0
  %v78 = vunpack.c.l.b16 %v66
  %v79 = vunpack.c.l.b16 %v67
  %v80 = vunpack.c.l.b16 %v68
  %v81 = vunpack.c.l.b16 %v69
  %v82 = vpack.c.b16 %v79, %v78
  %v83 = vpack.c.b16 %v81, %v80
  %vm86 = vcmask 261120
  %v88 = vsel %vm86, %v65, 0
  %90 = vmatpush.bf16.msra.mxu0 0
  %91 = vmatpush.bf16.msra.mxu0 0
  %92 = vmatpush.bf16.msra.mxu0 0
  %93 = vmatpush.bf16.msra.mxu0 0
  %94 = vmatpush.bf16.msra.mxu0 0
  %95 = vmatpush.bf16.msra.mxu0 0
  %96 = vmatpush.bf16.msra.mxu0 %v83
  %97 = vmatpush.bf16.msra.mxu0 %v82
  %98 = vmatmul.bf16.gmra.mxu0 %v88
  %v99 = vpop.f32.mrf.mxu0
  %v100 = vadd.f32 %v72, %v99
  %v101 = vpop.f32.mrf.mxu0
  %v102 = vadd.f32 %v72, %v101
  %103 = vdwg.mxu0
  %v104 = vmul.f32 %v100, 0.17677669
  %v105 = vmul.f32 %v102, 0.17677669
  %v106 = vld [vmem:[%s3] sm:$0xf]
  %v107 = vld [vmem:[%s3 + $0x4] sm:$0xf]
  %v108 = vld [vmem:[%s3 + $0x8] sm:$0xf]
  %v109 = vld [vmem:[%s3 + $0xc] sm:$0xf]
  %v110 = vld [vmem:[%s6] sm:$0x1]
  %v112 = vperm.slane %v110, 0
  %v118 = vunpack.c.l.b16 %v106
  %v119 = vunpack.c.l.b16 %v107
  %v120 = vunpack.c.l.b16 %v108
  %v121 = vunpack.c.l.b16 %v109
  %v122 = vpack.c.b16 %v119, %v118
  %v123 = vpack.c.b16 %v121, %v120
  %126 = vmatpush.bf16.msra.mxu0 0
  %127 = vmatpush.bf16.msra.mxu0 0
  %128 = vmatpush.bf16.msra.mxu0 0
  %129 = vmatpush.bf16.msra.mxu0 0
  %130 = vmatpush.bf16.msra.mxu0 0
  %131 = vmatpush.bf16.msra.mxu0 0
  %132 = vmatpush.bf16.msra.mxu0 %v123
  %133 = vmatpush.bf16.msra.mxu0 %v122
  %134 = vmatmul.bf16.gmra.mxu0 %v88
  %v135 = vpop.f32.mrf.mxu0
  %v136 = vadd.f32 %v112, %v135
  %v137 = vpop.f32.mrf.mxu0
  %v138 = vadd.f32 %v112, %v137
  %139 = vdwg.mxu0
  %v140 = vld [vmem:[%s4] sm:$0xf]
  %v141 = vld [vmem:[%s4 + $0x4] sm:$0xf]
  %v142 = vld [vmem:[%s4 + $0x8] sm:$0xf]
  %v143 = vld [vmem:[%s4 + $0xc] sm:$0xf]
  %v144 = vld [vmem:[%s7] sm:$0x1]
  %v146 = vperm.slane %v144, 0
  %v152 = vunpack.c.l.b16 %v140
  %v153 = vunpack.c.l.b16 %v141
  %v154 = vunpack.c.l.b16 %v142
  %v155 = vunpack.c.l.b16 %v143
  %v156 = vpack.c.b16 %v153, %v152
  %v157 = vpack.c.b16 %v155, %v154
  %160 = vmatpush.bf16.msra.mxu0 0
  %161 = vmatpush.bf16.msra.mxu0 0
  %162 = vmatpush.bf16.msra.mxu0 0
  %163 = vmatpush.bf16.msra.mxu0 0
  %164 = vmatpush.bf16.msra.mxu0 0
  %165 = vmatpush.bf16.msra.mxu0 0
  %166 = vmatpush.bf16.msra.mxu0 %v157
  %167 = vmatpush.bf16.msra.mxu0 %v156
  %168 = vmatmul.bf16.gmra.mxu0 %v88
  %v169 = vpop.f32.mrf.mxu0
  %v170 = vadd.f32 %v146, %v169
  %v171 = vpop.f32.mrf.mxu0
  %v172 = vadd.f32 %v146, %v171
  %173 = vdwg.mxu0
  %v174 = vpack.c.bf16 %v104, %v104
  %v175 = vpack.c.bf16 %v105, %v105
  %v176 = vpack.c.bf16 %v136, %v136
  %v177 = vpack.c.bf16 %v138, %v138
  %v178 = vpack.c.bf16 %v170, %v170
  %v179 = vpack.c.bf16 %v172, %v172
  %v181 = vsel %vm86, %v174, 0
  %v184 = vsel %vm86, %v176, 0
  %186 = vmatpush.bf16.xpose.msra.mxu0 0
  %187 = vmatpush.bf16.xpose.msra.mxu0 0
  %188 = vmatpush.bf16.xpose.msra.mxu0 0
  %189 = vmatpush.bf16.xpose.msra.mxu0 0
  %190 = vmatpush.bf16.xpose.msra.mxu0 0
  %191 = vmatpush.bf16.xpose.msra.mxu0 0
  %192 = vmatpush.bf16.xpose.msra.mxu0 0
  %193 = vmatpush.bf16.xpose.msra.mxu0 %v184
  %194 = vmatmul.bf16.gmra.mxu0 %v181
  %v195 = vpop.f32.mrf.mxu0
  %v196 = vadd.f32 0.0, %v195
  %v197 = vpop.f32.mrf.mxu0
  %198 = vdwg.mxu0
  %v200 = vsel %vm86, %v175, 0
  %v203 = vsel %vm86, %v177, 0
  %205 = vmatpush.bf16.xpose.msra.mxu0 0
  %206 = vmatpush.bf16.xpose.msra.mxu0 0
  %207 = vmatpush.bf16.xpose.msra.mxu0 0
  %208 = vmatpush.bf16.xpose.msra.mxu0 0
  %209 = vmatpush.bf16.xpose.msra.mxu0 0
  %210 = vmatpush.bf16.xpose.msra.mxu0 0
  %211 = vmatpush.bf16.xpose.msra.mxu0 0
  %212 = vmatpush.bf16.xpose.msra.mxu0 %v203
  %213 = vmatmul.bf16.gmra.mxu0 %v200
  %v214 = vpop.f32.mrf.mxu0
  %v215 = vadd.f32 0.0, %v214
  %v216 = vpop.f32.mrf.mxu0
  %217 = vdwg.mxu0
  %v219 = vrot.slane %v64, 1
  %vm221 = vcmp.gt.f32.partialorder %v64, 0.5
  %vm222 = vcmp.gt.f32.partialorder %v219, 0.5
  %v223 = vsel %vm221, 1, 0
  %v224 = vsel %vm222, 1, 0
  %v225 = vperm.slane %v223, 0
  %v226 = vperm.slane %v224, 0
  %vm227 = vcmp.eq.s32.totalorder %v225, 1
  %vm228 = vcmp.eq.s32.totalorder %v226, 1
  %v229 = vsel %vm227, %v196, -1e+30
  %v230 = vsel %vm228, %v215, -1e+30
  %vm231 = vcmask 64512
  %v232 = vsel %vm231, %v229, -inf
  %233 = vmax.xlane.f32.xlu0 %v232
  %v234 = vpop.xlane.xlu0 %233
  %v235 = vsel %vm231, %v230, -inf
  %236 = vmax.xlane.f32.xlu0 %v235
  %v237 = vpop.xlane.xlu0 %236
  %v238 = vsub.f32 %v229, %v234
  %v239 = vsub.f32 %v230, %v237
  %v240 = vmul.f32 %v238, 1.442695
  %v241 = vpow.pop %v240
  %v242 = vmul.f32 %v239, 1.442695
  %v243 = vpow.pop %v242
  %v244 = vsel %vm231, %v241, 0.0
  %245 = vadd.xlane.f32.xlu0 %v244
  %v246 = vpop.xlane.xlu0 %245
  %v247 = vsel %vm231, %v243, 0.0
  %248 = vadd.xlane.f32.xlu0 %v247
  %v249 = vpop.xlane.xlu0 %248
  %v250 = vrcp.pop %v246
  %v251 = vrcp.pop %v249
  %v252 = vmul.f32 %v241, %v250
  %v253 = vmul.f32 %v243, %v251
  %v254 = vpack.c.bf16 %v252, %v252
  %v255 = vpack.c.bf16 %v253, %v253
  %v257 = vsel %vm231, %v254, 0
  %vm259 = vcmask 1043456
  %v261 = vsel %vm259, %v178, 0
  %263 = vmatpush.bf16.msra.mxu0 0
  %264 = vmatpush.bf16.msra.mxu0 0
  %265 = vmatpush.bf16.msra.mxu0 0
  %266 = vmatpush.bf16.msra.mxu0 0
  %267 = vmatpush.bf16.msra.mxu0 0
  %268 = vmatpush.bf16.msra.mxu0 0
  %269 = vmatpush.bf16.msra.mxu0 0
  %270 = vmatpush.bf16.msra.mxu0 %v261
  %271 = vmatmul.bf16.gmra.mxu0 %v257
  %v272 = vpop.f32.mrf.mxu0
  %v273 = vadd.f32 0.0, %v272
  %v274 = vpop.f32.mrf.mxu0
  %275 = vdwg.mxu0
  %v277 = vsel %vm231, %v255, 0
  %v280 = vsel %vm259, %v179, 0
  %282 = vmatpush.bf16.msra.mxu0 0
  %283 = vmatpush.bf16.msra.mxu0 0
  %284 = vmatpush.bf16.msra.mxu0 0
  %285 = vmatpush.bf16.msra.mxu0 0
  %286 = vmatpush.bf16.msra.mxu0 0
  %287 = vmatpush.bf16.msra.mxu0 0
  %288 = vmatpush.bf16.msra.mxu0 0
  %289 = vmatpush.bf16.msra.mxu0 %v280
  %290 = vmatmul.bf16.gmra.mxu0 %v277
  %v291 = vpop.f32.mrf.mxu0
  %v292 = vadd.f32 0.0, %v291
  %v293 = vpop.f32.mrf.mxu0
  %294 = vdwg.mxu0
  %v295 = vpack.c.bf16 %v292, %v273
  %v296 = vld [vmem:[%s8] sm:$0xf]
  %v297 = vld [vmem:[%s8 + $0x4] sm:$0xf]
  %v298 = vld [vmem:[%s8 + $0x8] sm:$0xf]
  %v299 = vld [vmem:[%s8 + $0xc] sm:$0xf]
  %v300 = vld [vmem:[%s9] sm:$0x1]
  %v302 = vperm.slane %v300, 0
  %v308 = vunpack.c.l.b16 %v296
  %v309 = vunpack.c.l.b16 %v297
  %v310 = vunpack.c.l.b16 %v298
  %v311 = vunpack.c.l.b16 %v299
  %v312 = vpack.c.b16 %v309, %v308
  %v313 = vpack.c.b16 %v311, %v310
  %v317 = vsel %vm86, %v295, 0
  %319 = vmatpush.bf16.msra.mxu0 0
  %320 = vmatpush.bf16.msra.mxu0 0
  %321 = vmatpush.bf16.msra.mxu0 0
  %322 = vmatpush.bf16.msra.mxu0 0
  %323 = vmatpush.bf16.msra.mxu0 0
  %324 = vmatpush.bf16.msra.mxu0 0
  %325 = vmatpush.bf16.msra.mxu0 %v313
  %326 = vmatpush.bf16.msra.mxu0 %v312
  %327 = vmatmul.bf16.gmra.mxu0 %v317
  %v328 = vpop.f32.mrf.mxu0
  %v329 = vadd.f32 %v302, %v328
  %v330 = vpop.f32.mrf.mxu0
  %v331 = vadd.f32 %v302, %v330
  %332 = vdwg.mxu0
  %v333 = vpack.c.bf16 %v331, %v329
  %v334 = vld [vmem:[%s10] sm:$0xf]
  %v335 = vld [vmem:[%s10 + $0x4] sm:$0xf]
  %v336 = vld [vmem:[%s10 + $0x8] sm:$0xf]
  %v337 = vld [vmem:[%s10 + $0xc] sm:$0xf]
  %v338 = vld [vmem:[%s11] sm:$0xf]
  %v339 = vld [vmem:[%s11 + $0x4] sm:$0xf]
  %v340 = vld [vmem:[%s11 + $0x8] sm:$0xf]
  %v341 = vld [vmem:[%s11 + $0xc] sm:$0xf]
  %v346 = vunpack.c.l.b16 %v338
  %v347 = vunpack.c.l.b16 %v339
  %v348 = vunpack.c.l.b16 %v340
  %v349 = vunpack.c.l.b16 %v341
  %v350 = vpack.c.b16 %v347, %v346
  %v351 = vpack.c.b16 %v349, %v348
  %v355 = vsel %vm86, %v333, 0
  %357 = vmatpush.bf16.msra.mxu0 0
  %358 = vmatpush.bf16.msra.mxu0 0
  %359 = vmatpush.bf16.msra.mxu0 0
  %360 = vmatpush.bf16.msra.mxu0 0
  %361 = vmatpush.bf16.msra.mxu0 0
  %362 = vmatpush.bf16.msra.mxu0 0
  %363 = vmatpush.bf16.msra.mxu0 %v351
  %364 = vmatpush.bf16.msra.mxu0 %v350
  %365 = vmatmul.bf16.gmra.mxu0 %v355
  %v366 = vpop.f32.mrf.mxu0
  %v367 = vadd.f32 0.0, %v366
  %v368 = vpop.f32.mrf.mxu0
  %v369 = vadd.f32 0.0, %v368
  %370 = vdwg.mxu0
  %v375 = vunpack.c.l.b16 %v334
  %v376 = vunpack.c.l.b16 %v335
  %v377 = vunpack.c.l.b16 %v336
  %v378 = vunpack.c.l.b16 %v337
  %v379 = vpack.c.b16 %v376, %v375
  %v380 = vpack.c.b16 %v378, %v377
  %383 = vmatpush.bf16.msra.mxu0 0
  %384 = vmatpush.bf16.msra.mxu0 0
  %385 = vmatpush.bf16.msra.mxu0 0
  %386 = vmatpush.bf16.msra.mxu0 0
  %387 = vmatpush.bf16.msra.mxu0 0
  %388 = vmatpush.bf16.msra.mxu0 0
  %389 = vmatpush.bf16.msra.mxu0 %v380
  %390 = vmatpush.bf16.msra.mxu0 %v379
  %391 = vmatmul.bf16.gmra.mxu0 %v88
  %v392 = vpop.f32.mrf.mxu0
  %v393 = vadd.f32 %v367, %v392
  %v394 = vpop.f32.mrf.mxu0
  %v395 = vadd.f32 %v369, %v394
  %396 = vdwg.mxu0
  %v397 = vxor.u32 %v393, 2147483648
  %v398 = vxor.u32 %v395, 2147483648
  %v399 = vmul.f32 %v397, 1.442695
  %v400 = vpow.pop %v399
  %v401 = vmul.f32 %v398, 1.442695
  %v402 = vpow.pop %v401
  %v403 = vadd.f32 %v400, 1.0
  %v404 = vadd.f32 %v402, 1.0
  %v405 = vrcp.pop %v403
  %v406 = vmul.f32 %v403, %v405
  %v407 = vsub.f32 1.0, %v406
  %v408 = vmul.f32 %v405, %v407
  %v409 = vadd.f32 %v405, %v408
  %vm410 = vweird.f32 %v403
  %vm411 = vweird.f32 %v405
  %vm412 = vmor %vm410, %vm411
  %v413 = vsel %vm412, %v405, %v409
  %v414 = vand.u32 2147483647, %v403
  %vm415 = vcmp.eq.f32.partialorder %v414, 8.507059e+37
  %v416 = vand.u32 %v403, 2147483648
  %v417 = vor.u32 1.1754944e-38, %v416
  %v418 = vsel %vm415, %v417, %v413
  %v419 = vmul.f32 1.0, %v418
  %v420 = vrcp.pop %v404
  %v421 = vmul.f32 %v404, %v420
  %v422 = vsub.f32 1.0, %v421
  %v423 = vmul.f32 %v420, %v422
  %v424 = vadd.f32 %v420, %v423
  %vm425 = vweird.f32 %v404
  %vm426 = vweird.f32 %v420
  %vm427 = vmor %vm425, %vm426
  %v428 = vsel %vm427, %v420, %v424
  %v429 = vand.u32 2147483647, %v404
  %vm430 = vcmp.eq.f32.partialorder %v429, 8.507059e+37
  %v431 = vand.u32 %v404, 2147483648
  %v432 = vor.u32 1.1754944e-38, %v431
  %v433 = vsel %vm430, %v432, %v428
  %v434 = vmul.f32 1.0, %v433
  %v435 = vmul.f32 %v419, %v62
  %v436 = vmul.f32 %v434, %v63
  %v437 = vpack.c.bf16 %v436, %v435
  %440 = vrot.lane.b32.xlu0 %v329, 32
  %v441 = vpop.permute.xlu0 %440
  %442 = vrot.lane.b32.xlu0 %v331, 32
  %v443 = vpop.permute.xlu0 %442
  %v446 = vmul.f32 %v419, %v441
  %v447 = vmul.f32 %v434, %v443
  %v448 = vpack.c.bf16 %v447, %v446
  %v449 = vld [vmem:[%s12] sm:$0xf]
  %v450 = vld [vmem:[%s12 + $0x4] sm:$0xf]
  %v451 = vld [vmem:[%s12 + $0x8] sm:$0xf]
  %v452 = vld [vmem:[%s12 + $0xc] sm:$0xf]
  %v453 = vld [vmem:[%s13] sm:$0xf]
  %v454 = vld [vmem:[%s13 + $0x4] sm:$0xf]
  %v455 = vld [vmem:[%s13 + $0x8] sm:$0xf]
  %v456 = vld [vmem:[%s13 + $0xc] sm:$0xf]
  %458 = vrot.lane.b32.xlu0 %v448, 96
  %v459 = vpop.permute.xlu0 %458
  %v464 = vunpack.c.l.b16 %v453
  %v465 = vunpack.c.l.b16 %v454
  %v466 = vunpack.c.l.b16 %v455
  %v467 = vunpack.c.l.b16 %v456
  %v468 = vpack.c.b16 %v465, %v464
  %v469 = vpack.c.b16 %v467, %v466
  %v473 = vsel %vm86, %v459, 0
  %475 = vmatpush.bf16.msra.mxu0 0
  %476 = vmatpush.bf16.msra.mxu0 0
  %477 = vmatpush.bf16.msra.mxu0 0
  %478 = vmatpush.bf16.msra.mxu0 0
  %479 = vmatpush.bf16.msra.mxu0 0
  %480 = vmatpush.bf16.msra.mxu0 0
  %481 = vmatpush.bf16.msra.mxu0 %v469
  %482 = vmatpush.bf16.msra.mxu0 %v468
  %483 = vmatmul.bf16.gmra.mxu0 %v473
  %v484 = vpop.f32.mrf.mxu0
  %v485 = vadd.f32 0.0, %v484
  %v486 = vpop.f32.mrf.mxu0
  %v487 = vadd.f32 0.0, %v486
  %488 = vdwg.mxu0
  %v493 = vunpack.c.l.b16 %v449
  %v494 = vunpack.c.l.b16 %v450
  %v495 = vunpack.c.l.b16 %v451
  %v496 = vunpack.c.l.b16 %v452
  %v497 = vpack.c.b16 %v494, %v493
  %v498 = vpack.c.b16 %v496, %v495
  %v502 = vsel %vm86, %v437, 0
  %504 = vmatpush.bf16.msra.mxu0 0
  %505 = vmatpush.bf16.msra.mxu0 0
  %506 = vmatpush.bf16.msra.mxu0 0
  %507 = vmatpush.bf16.msra.mxu0 0
  %508 = vmatpush.bf16.msra.mxu0 0
  %509 = vmatpush.bf16.msra.mxu0 0
  %510 = vmatpush.bf16.msra.mxu0 %v498
  %511 = vmatpush.bf16.msra.mxu0 %v497
  %512 = vmatmul.bf16.gmra.mxu0 %v502
  %v513 = vpop.f32.mrf.mxu0
  %v514 = vadd.f32 %v485, %v513
  %v515 = vpop.f32.mrf.mxu0
  %v516 = vadd.f32 %v487, %v515
  %517 = vdwg.mxu0
  %v518 = vld [vmem:[%s14] sm:$0x1]
  %v520 = vperm.slane %v518, 0
  %v522 = vadd.f32 %v514, %v520
  %v523 = vadd.f32 %v516, %v520
  %v524 = vld [vmem:[%s15] sm:$0xf]
  %v525 = vld [vmem:[%s15 + $0x4] sm:$0xf]
  %v526 = vld [vmem:[%s15 + $0x8] sm:$0xf]
  %v527 = vld [vmem:[%s15 + $0xc] sm:$0xf]
  %v528 = vld [vmem:[%s16] sm:$0xf]
  %v529 = vld [vmem:[%s16 + $0x4] sm:$0xf]
  %v530 = vld [vmem:[%s16 + $0x8] sm:$0xf]
  %v531 = vld [vmem:[%s16 + $0xc] sm:$0xf]
  %v536 = vunpack.c.l.b16 %v528
  %v537 = vunpack.c.l.b16 %v529
  %v538 = vunpack.c.l.b16 %v530
  %v539 = vunpack.c.l.b16 %v531
  %v540 = vpack.c.b16 %v537, %v536
  %v541 = vpack.c.b16 %v539, %v538
  %544 = vmatpush.bf16.msra.mxu0 0
  %545 = vmatpush.bf16.msra.mxu0 0
  %546 = vmatpush.bf16.msra.mxu0 0
  %547 = vmatpush.bf16.msra.mxu0 0
  %548 = vmatpush.bf16.msra.mxu0 0
  %549 = vmatpush.bf16.msra.mxu0 0
  %550 = vmatpush.bf16.msra.mxu0 %v541
  %551 = vmatpush.bf16.msra.mxu0 %v540
  %552 = vmatmul.bf16.gmra.mxu0 %v473
  %v553 = vpop.f32.mrf.mxu0
  %v554 = vadd.f32 0.0, %v553
  %v555 = vpop.f32.mrf.mxu0
  %v556 = vadd.f32 0.0, %v555
  %557 = vdwg.mxu0
  %v562 = vunpack.c.l.b16 %v524
  %v563 = vunpack.c.l.b16 %v525
  %v564 = vunpack.c.l.b16 %v526
  %v565 = vunpack.c.l.b16 %v527
  %v566 = vpack.c.b16 %v563, %v562
  %v567 = vpack.c.b16 %v565, %v564
  %570 = vmatpush.bf16.msra.mxu0 0
  %571 = vmatpush.bf16.msra.mxu0 0
  %572 = vmatpush.bf16.msra.mxu0 0
  %573 = vmatpush.bf16.msra.mxu0 0
  %574 = vmatpush.bf16.msra.mxu0 0
  %575 = vmatpush.bf16.msra.mxu0 0
  %576 = vmatpush.bf16.msra.mxu0 %v567
  %577 = vmatpush.bf16.msra.mxu0 %v566
  %578 = vmatmul.bf16.gmra.mxu0 %v502
  %v579 = vpop.f32.mrf.mxu0
  %v580 = vadd.f32 %v554, %v579
  %v581 = vpop.f32.mrf.mxu0
  %v582 = vadd.f32 %v556, %v581
  %583 = vdwg.mxu0
  %v584 = vld [vmem:[%s17] sm:$0x1]
  %v586 = vperm.slane %v584, 0
  %v588 = vadd.f32 %v580, %v586
  %v589 = vadd.f32 %v582, %v586
  %v591 = vrot.slane %v522, 1
  %v592 = vrot.slane %v522, 2
  %v593 = vrot.slane %v522, 3
  %v594 = vrot.slane %v522, 4
  %v595 = vrot.slane %v522, 5
  %v596 = vrot.slane %v522, 6
  %v597 = vrot.slane %v522, 7
  %vm605 = vcmask 516096
  %606 = vst.msk [vmem:[%s18] sm:$0x1] %vm605, %v522
  %607 = vst.msk [vmem:[%s18 + $0x2] sm:$0x1] %vm605, %v591
  %608 = vst.msk [vmem:[%s18 + $0x4] sm:$0x1] %vm605, %v592
  %609 = vst.msk [vmem:[%s18 + $0x6] sm:$0x1] %vm605, %v593
  %610 = vst.msk [vmem:[%s18 + $0x8] sm:$0x1] %vm605, %v594
  %611 = vst.msk [vmem:[%s18 + $0xa] sm:$0x1] %vm605, %v595
  %612 = vst.msk [vmem:[%s18 + $0xc] sm:$0x1] %vm605, %v596
  %613 = vst.msk [vmem:[%s18 + $0xe] sm:$0x1] %vm605, %v597
  %v615 = vrot.slane %v588, 1
  %v616 = vrot.slane %v588, 2
  %v617 = vrot.slane %v588, 3
  %v618 = vrot.slane %v588, 4
  %v619 = vrot.slane %v588, 5
  %v620 = vrot.slane %v588, 6
  %v621 = vrot.slane %v588, 7
  %629 = vst.msk [vmem:[%s19] sm:$0x1] %vm605, %v588
  %630 = vst.msk [vmem:[%s19 + $0x2] sm:$0x1] %vm605, %v615
  %631 = vst.msk [vmem:[%s19 + $0x4] sm:$0x1] %vm605, %v616
  %632 = vst.msk [vmem:[%s19 + $0x6] sm:$0x1] %vm605, %v617
  %633 = vst.msk [vmem:[%s19 + $0x8] sm:$0x1] %vm605, %v618
  %634 = vst.msk [vmem:[%s19 + $0xa] sm:$0x1] %vm605, %v619
  %635 = vst.msk [vmem:[%s19 + $0xc] sm:$0x1] %vm605, %v620
  %636 = vst.msk [vmem:[%s19 + $0xe] sm:$0x1] %vm605, %v621
  %v638 = vrot.slane %v523, 1
  %v639 = vrot.slane %v523, 2
  %v640 = vrot.slane %v523, 3
  %v641 = vrot.slane %v523, 4
  %v642 = vrot.slane %v523, 5
  %v643 = vrot.slane %v523, 6
  %v644 = vrot.slane %v523, 7
  %652 = vst.msk [vmem:[%s18 + $0x1] sm:$0x1] %vm605, %v523
  %653 = vst.msk [vmem:[%s18 + $0x3] sm:$0x1] %vm605, %v638
  %654 = vst.msk [vmem:[%s18 + $0x5] sm:$0x1] %vm605, %v639
  %655 = vst.msk [vmem:[%s18 + $0x7] sm:$0x1] %vm605, %v640
  %656 = vst.msk [vmem:[%s18 + $0x9] sm:$0x1] %vm605, %v641
  %657 = vst.msk [vmem:[%s18 + $0xb] sm:$0x1] %vm605, %v642
  %658 = vst.msk [vmem:[%s18 + $0xd] sm:$0x1] %vm605, %v643
  %659 = vst.msk [vmem:[%s18 + $0xf] sm:$0x1] %vm605, %v644
  %v661 = vrot.slane %v589, 1
  %v662 = vrot.slane %v589, 2
  %v663 = vrot.slane %v589, 3
  %v664 = vrot.slane %v589, 4
  %v665 = vrot.slane %v589, 5
  %v666 = vrot.slane %v589, 6
  %v667 = vrot.slane %v589, 7
  %675 = vst.msk [vmem:[%s19 + $0x1] sm:$0x1] %vm605, %v589
  %676 = vst.msk [vmem:[%s19 + $0x3] sm:$0x1] %vm605, %v661
  %677 = vst.msk [vmem:[%s19 + $0x5] sm:$0x1] %vm605, %v662
  %678 = vst.msk [vmem:[%s19 + $0x7] sm:$0x1] %vm605, %v663
  %679 = vst.msk [vmem:[%s19 + $0x9] sm:$0x1] %vm605, %v664
  %680 = vst.msk [vmem:[%s19 + $0xb] sm:$0x1] %vm605, %v665
  %681 = vst.msk [vmem:[%s19 + $0xd] sm:$0x1] %vm605, %v666
  %682 = vst.msk [vmem:[%s19 + $0xf] sm:$0x1] %vm605, %v667
  // Predicated region
  $region74: #{self_attention_bidaf.2} parent=0 // pred_check
    _
  $region75: #{self_attention_bidaf.2} parent=0 // pred_check_branch
    %684 = sbr.rel (0) target = $region77
  $region76: #{self_attention_bidaf.2} parent=0 // pred_region
    _
  $region77: #{self_attention_bidaf.2} parent=0 // pred_fallthru
    _
  // Predicated region
  $region78: #{self_attention_bidaf.2} parent=0 // pred_check
    _
  $region79: #{self_attention_bidaf.2} parent=0 // pred_check_branch
    %686 = sbr.rel (0) target = $region81
  $region80: #{self_attention_bidaf.2} parent=0 // pred_region
    _
  $region81: #{self_attention_bidaf.2} parent=0 // pred_fallthru
    _
  // Predicated region
  $region82: #{self_attention_bidaf.2} parent=0 // pred_check
    _
  $region83: #{self_attention_bidaf.2} parent=0 // pred_check_branch
    %688 = sbr.rel (0) target = $region85
  $region84: #{self_attention_bidaf.2} parent=0 // pred_region
    _
  $region85: #{self_attention_bidaf.2} parent=0 // pred_fallthru
    _
  // Predicated region
  $region86: #{self_attention_bidaf.2} parent=0 // pred_check
    _
  $region87: #{self_attention_bidaf.2} parent=0 // pred_check_branch
    %690 = sbr.rel (0) target = $region89
  $region88: #{self_attention_bidaf.2} parent=0 // pred_region
    _
  $region89: #{self_attention_bidaf.2} parent=0 // pred_fallthru
    _

</llo_original>
